<compile_context>
chip_gen: v7x
topology: tpu7x:2x2x1
jax: 0.10.0
libtpu: 0.0.40
codegen_flags: <defaults>
</compile_context>

<pallas_src>
import functools

import jax
import jax.numpy as jnp
import numpy as np
from jax.experimental import pallas as pl
from jax.experimental.pallas import tpu as pltpu


def _round_up(a, b):
    return (a + b - 1) // b * b


def _triplet_adp_kernel(x_row_ref, x_col_ref, sq_row_ref, sq_col_ref,
                        t_row_ref, t_col_ref, prob_ref,
                        loss_ref, corr_ref,
                        m_pos_ref, z_pos_ref, num_pos_ref,
                        m_neg_ref, z_neg_ref, num_neg_ref,
                        *, alpha, gamma, n_valid, tile_m, tile_n, mxu_dtype):
    i = pl.program_id(0)
    j = pl.program_id(1)
    num_j = pl.num_programs(1)

    # ---- (re)initialize running accumulators at the start of each row sweep
    @pl.when(j == 0)
    def _init():
        m_pos_ref[...] = jnp.full_like(m_pos_ref, -jnp.inf)
        m_neg_ref[...] = jnp.full_like(m_neg_ref, -jnp.inf)
        z_pos_ref[...] = jnp.zeros_like(z_pos_ref)
        z_neg_ref[...] = jnp.zeros_like(z_neg_ref)
        num_pos_ref[...] = jnp.zeros_like(num_pos_ref)
        num_neg_ref[...] = jnp.zeros_like(num_neg_ref)

    # ---- pairwise euclidean distances for this (row, col) block ------------
    gram = jax.lax.dot_general(            # contract dim 1 of both: no transpose
        x_row_ref[...].astype(mxu_dtype), x_col_ref[...].astype(mxu_dtype),
        dimension_numbers=(((1,), (1,)), ((), ())),
        preferred_element_type=jnp.float32)                     # (TM, TN)
    dist2 = sq_row_ref[...] + sq_col_ref[...] - 2.0 * gram
    dist = jnp.sqrt(jnp.maximum(dist2, 1e-12))

    # ---- boolean masks; padded columns are excluded -------------------------
    col_ids = jax.lax.broadcasted_iota(jnp.int32, (1, tile_n), 1) + j * tile_n
    col_valid = col_ids < n_valid                               # (1, TN)
    same = t_row_ref[...] == t_col_ref[...]                     # (TM, TN) bool
    is_pos = jnp.logical_and(same, col_valid)
    is_neg = jnp.logical_and(jnp.logical_not(same), col_valid)

    ad = alpha * dist
    dp = jnp.where(is_pos, ad, 0.0)     # masked entries -> 0 (matches reference)
    dn = jnp.where(is_neg, -ad, 0.0)

    # ---- online softmax-weighted row reductions -----------------------------
    # positive branch: furthest_positive = sum(dist * softmax(alpha*dist | pos))
    m_old = m_pos_ref[...]
    m_new = jnp.maximum(m_old, jnp.max(dp, axis=1, keepdims=True))
    rescale = jnp.exp(m_old - m_new)
    e = jnp.where(is_pos, jnp.exp(dp - m_new), 0.0)             # single exp
    z_pos_ref[...] = z_pos_ref[...] * rescale + jnp.sum(e, axis=1, keepdims=True)
    num_pos_ref[...] = (num_pos_ref[...] * rescale
                        + jnp.sum(dist * e, axis=1, keepdims=True))
    m_pos_ref[...] = m_new

    # negative branch: closest_negative = sum(dist * softmax(-alpha*dist | neg))
    m_old = m_neg_ref[...]
    m_new = jnp.maximum(m_old, jnp.max(dn, axis=1, keepdims=True))
    rescale = jnp.exp(m_old - m_new)
    e = jnp.where(is_neg, jnp.exp(dn - m_new), 0.0)
    z_neg_ref[...] = z_neg_ref[...] * rescale + jnp.sum(e, axis=1, keepdims=True)
    num_neg_ref[...] = (num_neg_ref[...] * rescale
                        + jnp.sum(dist * e, axis=1, keepdims=True))
    m_neg_ref[...] = m_new

    # ---- finalize this row tile after the last column tile ------------------
    @pl.when(j == num_j - 1)
    def _finalize():
        fp = num_pos_ref[...] * pl.reciprocal(z_pos_ref[...] + 1e-6, approx=True)
        cn = num_neg_ref[...] * pl.reciprocal(z_neg_ref[...] + 1e-6, approx=True)
        # SoftMarginLoss(y=1): log(1+exp(-x)), x = gamma*(cn-fp); stable softplus.
        t = -gamma * (cn - fp)
        per_sample = jnp.maximum(t, 0.0) + jnp.log1p(jnp.exp(-jnp.abs(t)))
        row_ids = jax.lax.broadcasted_iota(jnp.int32, (tile_m, 1), 0) + i * tile_m
        row_valid = (row_ids < n_valid).astype(jnp.float32)     # exclude padding
        loss_sum = jnp.sum(prob_ref[...] * per_sample * row_valid,
                           axis=0, keepdims=True)               # (1, 1)
        corr_sum = jnp.sum((cn >= fp).astype(jnp.float32) * row_valid,
                           axis=0, keepdims=True)
        # Lane-dense (8,128) output blocks: broadcast the per-tile scalar.
        loss_ref[...] = jnp.broadcast_to(loss_sum, loss_ref.shape)
        corr_ref[...] = jnp.broadcast_to(corr_sum, corr_ref.shape)


def triplet_loss_adp(inputs, targets, prob, *, alpha=1.0, gamma=1.0,
                     normalize_feature=False, tile=None,
                     mxu_dtype=jnp.float32):
    """Forward of TripletLoss_ADP. Returns (loss, correct, N)."""
    inputs = inputs.astype(jnp.float32)
    if normalize_feature:
        inputs = inputs / (jnp.linalg.norm(inputs, axis=-1, keepdims=True) + 1e-12)

    n, d = inputs.shape
    if tile is None:
        tile = 256                                 # MXU-native on v6e/v7x, 2x128 on v5e
    tile = max(128, min(_round_up(tile, 128), _round_up(n, 128)))
    n_pad = _round_up(n, tile)
    d_pad = _round_up(d, 128)                      # MXU-friendly contraction dim
    grid_m = n_pad // tile
    grid_n = n_pad // tile

    # Zero-padded, f32 inputs; padded targets get a sentinel label.
    x = jnp.zeros((n_pad, d_pad), jnp.float32).at[:n, :d].set(inputs)
    tgt = jnp.full((n_pad,), -1, jnp.int32).at[:n].set(targets.astype(jnp.int32))
    prb = jnp.zeros((n_pad,), jnp.float32).at[:n].set(prob.astype(jnp.float32))
    sq = jnp.sum(x * x, axis=1)

    # Both orientations prepared here so the kernel never transposes anything.
    sq_row, sq_col = sq.reshape(n_pad, 1), sq.reshape(1, n_pad)
    t_row, t_col = tgt.reshape(n_pad, 1), tgt.reshape(1, n_pad)
    prb_row = prb.reshape(n_pad, 1)

    kernel = functools.partial(
        _triplet_adp_kernel, alpha=float(alpha), gamma=float(gamma),
        n_valid=n, tile_m=tile, tile_n=tile, mxu_dtype=mxu_dtype)

    # VMEM budget: double-buffered x tiles + (tile,tile) temporaries + scratch.
    est = 4 * (4 * tile * d_pad + 10 * tile * tile + 8 * tile * 128)
    vmem_limit = int(min(max(2 * est, 16 * 2**20), 56 * 2**20))

    row_map = lambda i, j: (i, 0)
    col_map = lambda i, j: (0, j)

    loss_part, corr_part = pl.pallas_call(
        kernel,
        grid=(grid_m, grid_n),
        in_specs=[
            pl.BlockSpec((tile, d_pad), lambda i, j: (i, 0)),   # x row tile
            pl.BlockSpec((tile, d_pad), lambda i, j: (j, 0)),   # x col tile
            pl.BlockSpec((tile, 1), row_map),                   # sq, row orientation
            pl.BlockSpec((1, tile), col_map),                   # sq, col orientation
            pl.BlockSpec((tile, 1), row_map),                   # targets, row
            pl.BlockSpec((1, tile), col_map),                   # targets, col
            pl.BlockSpec((tile, 1), row_map),                   # prob, row
        ],
        out_specs=(
            pl.BlockSpec((8, 128), lambda i, j: (i, 0)),        # per-row-tile loss sum
            pl.BlockSpec((8, 128), lambda i, j: (i, 0)),        # per-row-tile correct
        ),
        out_shape=(
            jax.ShapeDtypeStruct((grid_m * 8, 128), jnp.float32),
            jax.ShapeDtypeStruct((grid_m * 8, 128), jnp.float32),
        ),
        scratch_shapes=[pltpu.VMEM((tile, 1), jnp.float32)] * 6,
        compiler_params=pltpu.CompilerParams(
            dimension_semantics=("parallel", "arbitrary"),
            vmem_limit_bytes=vmem_limit),
    )(x, x, sq_row, sq_col, t_row, t_col, prb_row)

    loss = jnp.sum(loss_part[::8, 0]) / n          # torch.mean over N rows
    # TODO(synk): PyTorch returns `correct` via .item(); here it stays a traced int32.
    correct = jnp.sum(corr_part[::8, 0]).astype(jnp.int32)
    return loss, correct, n


def _reference(inputs, targets, prob, alpha, gamma, normalize_feature=False):
    """Pure-JAX replica of the PyTorch module (for verification)."""
    x = inputs.astype(jnp.float32)
    if normalize_feature:
        x = x / (jnp.linalg.norm(x, axis=-1, keepdims=True) + 1e-12)
    sq = jnp.sum(x * x, axis=1, keepdims=True)
    dist = jnp.sqrt(jnp.maximum(sq + sq.T - 2.0 * (x @ x.T), 1e-12))
    t = targets.reshape(-1, 1)
    is_pos = (t == t.T).astype(jnp.float32)
    is_neg = 1.0 - is_pos
    dist_ap = dist * is_pos
    dist_an = dist * is_neg

    def sw(dmat, mask):
        mx = jnp.max(dmat * mask, axis=1, keepdims=True)
        e = jnp.exp(dmat - mx) * mask
        return e / (jnp.sum(e, axis=1, keepdims=True) + 1e-6)

    fp = jnp.sum(dist_ap * sw(dist_ap * alpha, is_pos), axis=1)
    cn = jnp.sum(dist_an * sw(-dist_an * alpha, is_neg), axis=1)
    per = jax.nn.softplus(-gamma * (cn - fp))
    return jnp.mean(prob * per), jnp.sum((cn >= fp).astype(jnp.int32))


if __name__ == "__main__":
    key = jax.random.PRNGKey(0)
    k1, k2, k3, k4 = jax.random.split(key, 4)

    # Small demo: N=8 embeddings of dim 32, 4 identity classes (2 samples each).
    N, D = 8, 32
    inputs = jax.random.normal(k1, (N, D), jnp.float32)
    targets = jnp.array([0, 0, 1, 1, 2, 2, 3, 3], jnp.int32)
    prob = jax.random.uniform(k2, (N,), jnp.float32)

    loss, correct, count = triplet_loss_adp(inputs, targets, prob,
                                            alpha=1.0, gamma=1.0)
    jax.block_until_ready((loss, correct))
    ref_loss, _ = _reference(inputs, targets, prob, 1.0, 1.0)
    np.testing.assert_allclose(float(loss), float(ref_loss), rtol=3e-2, atol=3e-2)
    assert count == N

    # Larger case: exercises the multi-tile grid, padding, and online reduction.
    N2, D2 = 300, 96
    inputs2 = jax.random.normal(k3, (N2, D2), jnp.float32)
    targets2 = jnp.arange(N2, dtype=jnp.int32) % 6
    prob2 = jax.random.uniform(k4, (N2,), jnp.float32)
    loss2, correct2, count2 = triplet_loss_adp(inputs2, targets2, prob2,
                                               alpha=1.0, gamma=1.0)
    jax.block_until_ready((loss2, correct2))
    ref_loss2, _ = _reference(inputs2, targets2, prob2, 1.0, 1.0)
    np.testing.assert_allclose(float(loss2), float(ref_loss2), rtol=3e-2, atol=3e-2)

    print("KERNEL_OK")
</pallas_src>

<mosaic_0001>
module attributes {stable_mosaic.version = 11 : i64} {
  func.func @_triplet_adp_kernel(%arg0: i32, %arg1: i32, %arg2: memref<128x128xf32, #tpu.memory_space<vmem>>, %arg3: memref<128x128xf32, #tpu.memory_space<vmem>>, %arg4: memref<128x1xf32, #tpu.memory_space<vmem>>, %arg5: memref<1x128xf32, #tpu.memory_space<vmem>>, %arg6: memref<128x1xi32, #tpu.memory_space<vmem>>, %arg7: memref<1x128xi32, #tpu.memory_space<vmem>>, %arg8: memref<128x1xf32, #tpu.memory_space<vmem>>, %arg9: memref<8x128xf32, #tpu.memory_space<vmem>>, %arg10: memref<8x128xf32, #tpu.memory_space<vmem>>, %arg11: memref<128x1xf32, #tpu.memory_space<vmem>>, %arg12: memref<128x1xf32, #tpu.memory_space<vmem>>, %arg13: memref<128x1xf32, #tpu.memory_space<vmem>>, %arg14: memref<128x1xf32, #tpu.memory_space<vmem>>, %arg15: memref<128x1xf32, #tpu.memory_space<vmem>>, %arg16: memref<128x1xf32, #tpu.memory_space<vmem>>) attributes {dimension_semantics = [#tpu.dimension_semantics<parallel>, #tpu.dimension_semantics<arbitrary>], iteration_bounds = array<i64: 1, 1>, scalar_prefetch = 0 : i64, scratch_operands = 6 : i64, tpu.core_type = #tpu.core_type<tc>, window_params = [{transform_indices = @transform_0, window_bounds = array<i64: 128, 128>}, {transform_indices = @transform_1, window_bounds = array<i64: 128, 128>}, {transform_indices = @transform_2, window_bounds = array<i64: 128, 1>}, {transform_indices = @transform_3, window_bounds = array<i64: 1, 128>}, {transform_indices = @transform_4, window_bounds = array<i64: 128, 1>}, {transform_indices = @transform_5, window_bounds = array<i64: 1, 128>}, {transform_indices = @transform_6, window_bounds = array<i64: 128, 1>}, {transform_indices = @transform_7, window_bounds = array<i64: 8, 128>}, {transform_indices = @transform_8, window_bounds = array<i64: 8, 128>}]} {
    %c0_i32 = arith.constant 0 : i32
    %0 = arith.cmpi eq, %arg1, %c0_i32 : i32
    %1 = arith.extui %0 : i1 to i32
    %c0_i32_0 = arith.constant 0 : i32
    %2 = arith.cmpi ne, %1, %c0_i32_0 : i32
    scf.if %2 {
      %cst_53 = arith.constant 0xFF800000 : f32
      %94 = vector.broadcast %cst_53 : f32 to vector<128x1xf32>
      %c0_54 = arith.constant 0 : index
      %c0_55 = arith.constant 0 : index
      %95 = vector.load %arg11[%c0_54, %c0_55] : memref<128x1xf32, #tpu.memory_space<vmem>>, vector<128x1xf32>
      tpu.vector_store %arg11[%c0_54, %c0_55], %94 {strides = array<i32>} : memref<128x1xf32, #tpu.memory_space<vmem>>, vector<128x1xf32>,
      %cst_56 = arith.constant 0xFF800000 : f32
      %96 = vector.broadcast %cst_56 : f32 to vector<128x1xf32>
      %c0_57 = arith.constant 0 : index
      %c0_58 = arith.constant 0 : index
      %97 = vector.load %arg14[%c0_57, %c0_58] : memref<128x1xf32, #tpu.memory_space<vmem>>, vector<128x1xf32>
      tpu.vector_store %arg14[%c0_57, %c0_58], %96 {strides = array<i32>} : memref<128x1xf32, #tpu.memory_space<vmem>>, vector<128x1xf32>,
      %cst_59 = arith.constant 0.000000e+00 : f32
      %98 = vector.broadcast %cst_59 : f32 to vector<128x1xf32>
      %c0_60 = arith.constant 0 : index
      %c0_61 = arith.constant 0 : index
      %99 = vector.load %arg12[%c0_60, %c0_61] : memref<128x1xf32, #tpu.memory_space<vmem>>, vector<128x1xf32>
      tpu.vector_store %arg12[%c0_60, %c0_61], %98 {strides = array<i32>} : memref<128x1xf32, #tpu.memory_space<vmem>>, vector<128x1xf32>,
      %cst_62 = arith.constant 0.000000e+00 : f32
      %100 = vector.broadcast %cst_62 : f32 to vector<128x1xf32>
      %c0_63 = arith.constant 0 : index
      %c0_64 = arith.constant 0 : index
      %101 = vector.load %arg15[%c0_63, %c0_64] : memref<128x1xf32, #tpu.memory_space<vmem>>, vector<128x1xf32>
      tpu.vector_store %arg15[%c0_63, %c0_64], %100 {strides = array<i32>} : memref<128x1xf32, #tpu.memory_space<vmem>>, vector<128x1xf32>,
      %cst_65 = arith.constant 0.000000e+00 : f32
      %102 = vector.broadcast %cst_65 : f32 to vector<128x1xf32>
      %c0_66 = arith.constant 0 : index
      %c0_67 = arith.constant 0 : index
      %103 = vector.load %arg13[%c0_66, %c0_67] : memref<128x1xf32, #tpu.memory_space<vmem>>, vector<128x1xf32>
      tpu.vector_store %arg13[%c0_66, %c0_67], %102 {strides = array<i32>} : memref<128x1xf32, #tpu.memory_space<vmem>>, vector<128x1xf32>,
      %cst_68 = arith.constant 0.000000e+00 : f32
      %104 = vector.broadcast %cst_68 : f32 to vector<128x1xf32>
      %c0_69 = arith.constant 0 : index
      %c0_70 = arith.constant 0 : index
      %105 = vector.load %arg16[%c0_69, %c0_70] : memref<128x1xf32, #tpu.memory_space<vmem>>, vector<128x1xf32>
      tpu.vector_store %arg16[%c0_69, %c0_70], %104 {strides = array<i32>} : memref<128x1xf32, #tpu.memory_space<vmem>>, vector<128x1xf32>,
    } else {
    }
    %c0 = arith.constant 0 : index
    %c0_1 = arith.constant 0 : index
    %3 = vector.load %arg2[%c0, %c0_1] : memref<128x128xf32, #tpu.memory_space<vmem>>, vector<128x128xf32>
    %c0_2 = arith.constant 0 : index
    %c0_3 = arith.constant 0 : index
    %4 = vector.load %arg3[%c0_2, %c0_3] : memref<128x128xf32, #tpu.memory_space<vmem>>, vector<128x128xf32>
    %cst = arith.constant dense<0.000000e+00> : vector<128x128xf32>
    %5 = tpu.matmul %3, %4, %cst {dimension_numbers = #tpu.dot_dimension_numbers<[1], [1], [0], [0], [0, 0, 1, 0], [], []>} : vector<128x128xf32>, vector<128x128xf32>, vector<128x128xf32> -> vector<128x128xf32>
    %c0_4 = arith.constant 0 : index
    %c0_5 = arith.constant 0 : index
    %6 = vector.load %arg4[%c0_4, %c0_5] : memref<128x1xf32, #tpu.memory_space<vmem>>, vector<128x1xf32>
    %c0_6 = arith.constant 0 : index
    %c0_7 = arith.constant 0 : index
    %7 = vector.load %arg5[%c0_6, %c0_7] : memref<1x128xf32, #tpu.memory_space<vmem>>, vector<1x128xf32>
    %8 = vector.broadcast %6 : vector<128x1xf32> to vector<128x128xf32>
    %9 = vector.broadcast %7 : vector<1x128xf32> to vector<128x128xf32>
    %10 = arith.addf %8, %9 : vector<128x128xf32>
    %cst_8 = arith.constant 2.000000e+00 : f32
    %11 = vector.broadcast %cst_8 : f32 to vector<128x128xf32>
    %12 = arith.mulf %11, %5 : vector<128x128xf32>
    %13 = arith.subf %10, %12 : vector<128x128xf32>
    %cst_9 = arith.constant 9.99999996E-13 : f32
    %14 = vector.broadcast %cst_9 : f32 to vector<128x128xf32>
    %15 = arith.maximumf %13, %14 : vector<128x128xf32>
    %16 = math.sqrt %15 : vector<128x128xf32>
    %17 = tpu.iota {dimensions = array<i32: 1>} : vector<1x128xi32>
    %c128_i32 = arith.constant 128 : i32
    %18 = arith.muli %arg1, %c128_i32 : i32
    %19 = vector.broadcast %18 : i32 to vector<1x128xi32>
    %20 = arith.addi %17, %19 : vector<1x128xi32>
    %c8_i32 = arith.constant 8 : i32
    %21 = vector.broadcast %c8_i32 : i32 to vector<1x128xi32>
    %22 = arith.cmpi slt, %20, %21 : vector<1x128xi32>
    %c0_10 = arith.constant 0 : index
    %c0_11 = arith.constant 0 : index
    %23 = vector.load %arg6[%c0_10, %c0_11] : memref<128x1xi32, #tpu.memory_space<vmem>>, vector<128x1xi32>
    %c0_12 = arith.constant 0 : index
    %c0_13 = arith.constant 0 : index
    %24 = vector.load %arg7[%c0_12, %c0_13] : memref<1x128xi32, #tpu.memory_space<vmem>>, vector<1x128xi32>
    %25 = vector.broadcast %23 : vector<128x1xi32> to vector<128x128xi32>
    %26 = vector.broadcast %24 : vector<1x128xi32> to vector<128x128xi32>
    %27 = arith.cmpi eq, %25, %26 : vector<128x128xi32>
    %28 = vector.broadcast %22 : vector<1x128xi1> to vector<128x128xi1>
    %29 = arith.andi %27, %28 : vector<128x128xi1>
    %cst_14 = arith.constant dense<true> : vector<128x128xi1>
    %30 = arith.xori %27, %cst_14 : vector<128x128xi1>
    %31 = vector.broadcast %22 : vector<1x128xi1> to vector<128x128xi1>
    %32 = arith.andi %30, %31 : vector<128x128xi1>
    %cst_15 = arith.constant 1.000000e+00 : f32
    %33 = vector.broadcast %cst_15 : f32 to vector<128x128xf32>
    %34 = arith.mulf %33, %16 : vector<128x128xf32>
    %cst_16 = arith.constant 0.000000e+00 : f32
    %35 = vector.broadcast %cst_16 : f32 to vector<128x128xf32>
    %36 = arith.select %29, %34, %35 : vector<128x128xi1>, vector<128x128xf32>
    %cst_17 = arith.constant 0.000000e+00 : f32
    %37 = vector.broadcast %cst_17 : f32 to vector<128x128xf32>
    %38 = arith.subf %37, %34 : vector<128x128xf32>
    %cst_18 = arith.constant 0.000000e+00 : f32
    %39 = vector.broadcast %cst_18 : f32 to vector<128x128xf32>
    %40 = arith.select %32, %38, %39 : vector<128x128xi1>, vector<128x128xf32>
    %c0_19 = arith.constant 0 : index
    %c0_20 = arith.constant 0 : index
    %41 = vector.load %arg11[%c0_19, %c0_20] : memref<128x1xf32, #tpu.memory_space<vmem>>, vector<128x1xf32>
    %cst_21 = arith.constant dense<0xFF800000> : vector<128xf32>
    %42 = vector.multi_reduction <maximumf>, %36, %cst_21 [1] : vector<128x128xf32> to vector<128xf32>
    %43 = vector.shape_cast %42 : vector<128xf32> to vector<128x1xf32>
    %44 = arith.maximumf %41, %43 : vector<128x1xf32>
    %45 = arith.subf %41, %44 : vector<128x1xf32>
    %46 = math.exp %45 : vector<128x1xf32>
    %47 = vector.broadcast %44 : vector<128x1xf32> to vector<128x128xf32>
    %48 = arith.subf %36, %47 : vector<128x128xf32>
    %49 = math.exp %48 : vector<128x128xf32>
    %cst_22 = arith.constant 0.000000e+00 : f32
    %50 = vector.broadcast %cst_22 : f32 to vector<128x128xf32>
    %51 = arith.select %29, %49, %50 : vector<128x128xi1>, vector<128x128xf32>
    %c0_23 = arith.constant 0 : index
    %c0_24 = arith.constant 0 : index
    %52 = vector.load %arg12[%c0_23, %c0_24] : memref<128x1xf32, #tpu.memory_space<vmem>>, vector<128x1xf32>
    %53 = arith.mulf %52, %46 : vector<128x1xf32>
    %cst_25 = arith.constant dense<0.000000e+00> : vector<128xf32>
    %54 = vector.multi_reduction <add>, %51, %cst_25 [1] : vector<128x128xf32> to vector<128xf32>
    %55 = vector.shape_cast %54 : vector<128xf32> to vector<128x1xf32>
    %56 = arith.addf %53, %55 : vector<128x1xf32>
    %c0_26 = arith.constant 0 : index
    %c0_27 = arith.constant 0 : index
    %57 = vector.load %arg12[%c0_26, %c0_27] : memref<128x1xf32, #tpu.memory_space<vmem>>, vector<128x1xf32>
    tpu.vector_store %arg12[%c0_26, %c0_27], %56 {strides = array<i32>} : memref<128x1xf32, #tpu.memory_space<vmem>>, vector<128x1xf32>,
    %c0_28 = arith.constant 0 : index
    %c0_29 = arith.constant 0 : index
    %58 = vector.load %arg13[%c0_28, %c0_29] : memref<128x1xf32, #tpu.memory_space<vmem>>, vector<128x1xf32>
    %59 = arith.mulf %58, %46 : vector<128x1xf32>
    %60 = arith.mulf %16, %51 : vector<128x128xf32>
    %cst_30 = arith.constant dense<0.000000e+00> : vector<128xf32>
    %61 = vector.multi_reduction <add>, %60, %cst_30 [1] : vector<128x128xf32> to vector<128xf32>
    %62 = vector.shape_cast %61 : vector<128xf32> to vector<128x1xf32>
    %63 = arith.addf %59, %62 : vector<128x1xf32>
    %c0_31 = arith.constant 0 : index
    %c0_32 = arith.constant 0 : index
    %64 = vector.load %arg13[%c0_31, %c0_32] : memref<128x1xf32, #tpu.memory_space<vmem>>, vector<128x1xf32>
    tpu.vector_store %arg13[%c0_31, %c0_32], %63 {strides = array<i32>} : memref<128x1xf32, #tpu.memory_space<vmem>>, vector<128x1xf32>,
    %c0_33 = arith.constant 0 : index
    %c0_34 = arith.constant 0 : index
    %65 = vector.load %arg11[%c0_33, %c0_34] : memref<128x1xf32, #tpu.memory_space<vmem>>, vector<128x1xf32>
    tpu.vector_store %arg11[%c0_33, %c0_34], %44 {strides = array<i32>} : memref<128x1xf32, #tpu.memory_space<vmem>>, vector<128x1xf32>,
    %c0_35 = arith.constant 0 : index
    %c0_36 = arith.constant 0 : index
    %66 = vector.load %arg14[%c0_35, %c0_36] : memref<128x1xf32, #tpu.memory_space<vmem>>, vector<128x1xf32>
    %cst_37 = arith.constant dense<0xFF800000> : vector<128xf32>
    %67 = vector.multi_reduction <maximumf>, %40, %cst_37 [1] : vector<128x128xf32> to vector<128xf32>
    %68 = vector.shape_cast %67 : vector<128xf32> to vector<128x1xf32>
    %69 = arith.maximumf %66, %68 : vector<128x1xf32>
    %70 = arith.subf %66, %69 : vector<128x1xf32>
    %71 = math.exp %70 : vector<128x1xf32>
    %72 = vector.broadcast %69 : vector<128x1xf32> to vector<128x128xf32>
    %73 = arith.subf %40, %72 : vector<128x128xf32>
    %74 = math.exp %73 : vector<128x128xf32>
    %cst_38 = arith.constant 0.000000e+00 : f32
    %75 = vector.broadcast %cst_38 : f32 to vector<128x128xf32>
    %76 = arith.select %32, %74, %75 : vector<128x128xi1>, vector<128x128xf32>
    %c0_39 = arith.constant 0 : index
    %c0_40 = arith.constant 0 : index
    %77 = vector.load %arg15[%c0_39, %c0_40] : memref<128x1xf32, #tpu.memory_space<vmem>>, vector<128x1xf32>
    %78 = arith.mulf %77, %71 : vector<128x1xf32>
    %cst_41 = arith.constant dense<0.000000e+00> : vector<128xf32>
    %79 = vector.multi_reduction <add>, %76, %cst_41 [1] : vector<128x128xf32> to vector<128xf32>
    %80 = vector.shape_cast %79 : vector<128xf32> to vector<128x1xf32>
    %81 = arith.addf %78, %80 : vector<128x1xf32>
    %c0_42 = arith.constant 0 : index
    %c0_43 = arith.constant 0 : index
    %82 = vector.load %arg15[%c0_42, %c0_43] : memref<128x1xf32, #tpu.memory_space<vmem>>, vector<128x1xf32>
    tpu.vector_store %arg15[%c0_42, %c0_43], %81 {strides = array<i32>} : memref<128x1xf32, #tpu.memory_space<vmem>>, vector<128x1xf32>,
    %c0_44 = arith.constant 0 : index
    %c0_45 = arith.constant 0 : index
    %83 = vector.load %arg16[%c0_44, %c0_45] : memref<128x1xf32, #tpu.memory_space<vmem>>, vector<128x1xf32>
    %84 = arith.mulf %83, %71 : vector<128x1xf32>
    %85 = arith.mulf %16, %76 : vector<128x128xf32>
    %cst_46 = arith.constant dense<0.000000e+00> : vector<128xf32>
    %86 = vector.multi_reduction <add>, %85, %cst_46 [1] : vector<128x128xf32> to vector<128xf32>
    %87 = vector.shape_cast %86 : vector<128xf32> to vector<128x1xf32>
    %88 = arith.addf %84, %87 : vector<128x1xf32>
    %c0_47 = arith.constant 0 : index
    %c0_48 = arith.constant 0 : index
    %89 = vector.load %arg16[%c0_47, %c0_48] : memref<128x1xf32, #tpu.memory_space<vmem>>, vector<128x1xf32>
    tpu.vector_store %arg16[%c0_47, %c0_48], %88 {strides = array<i32>} : memref<128x1xf32, #tpu.memory_space<vmem>>, vector<128x1xf32>,
    %c0_49 = arith.constant 0 : index
    %c0_50 = arith.constant 0 : index
    %90 = vector.load %arg14[%c0_49, %c0_50] : memref<128x1xf32, #tpu.memory_space<vmem>>, vector<128x1xf32>
    tpu.vector_store %arg14[%c0_49, %c0_50], %69 {strides = array<i32>} : memref<128x1xf32, #tpu.memory_space<vmem>>, vector<128x1xf32>,
    %c0_i32_51 = arith.constant 0 : i32
    %91 = arith.cmpi eq, %arg1, %c0_i32_51 : i32
    %92 = arith.extui %91 : i1 to i32
    %c0_i32_52 = arith.constant 0 : i32
    %93 = arith.cmpi ne, %92, %c0_i32_52 : i32
    scf.if %93 {
      %c0_53 = arith.constant 0 : index
      %c0_54 = arith.constant 0 : index
      %94 = vector.load %arg13[%c0_53, %c0_54] : memref<128x1xf32, #tpu.memory_space<vmem>>, vector<128x1xf32>
      %c0_55 = arith.constant 0 : index
      %c0_56 = arith.constant 0 : index
      %95 = vector.load %arg12[%c0_55, %c0_56] : memref<128x1xf32, #tpu.memory_space<vmem>>, vector<128x1xf32>
      %cst_57 = arith.constant 9.99999997E-7 : f32
      %96 = vector.broadcast %cst_57 : f32 to vector<128x1xf32>
      %97 = arith.addf %95, %96 : vector<128x1xf32>
      %98 = tpu.reciprocal %97 {approx = true} : vector<128x1xf32> -> vector<128x1xf32>
      %99 = arith.mulf %94, %98 : vector<128x1xf32>
      %c0_58 = arith.constant 0 : index
      %c0_59 = arith.constant 0 : index
      %100 = vector.load %arg16[%c0_58, %c0_59] : memref<128x1xf32, #tpu.memory_space<vmem>>, vector<128x1xf32>
      %c0_60 = arith.constant 0 : index
      %c0_61 = arith.constant 0 : index
      %101 = vector.load %arg15[%c0_60, %c0_61] : memref<128x1xf32, #tpu.memory_space<vmem>>, vector<128x1xf32>
      %cst_62 = arith.constant 9.99999997E-7 : f32
      %102 = vector.broadcast %cst_62 : f32 to vector<128x1xf32>
      %103 = arith.addf %101, %102 : vector<128x1xf32>
      %104 = tpu.reciprocal %103 {approx = true} : vector<128x1xf32> -> vector<128x1xf32>
      %105 = arith.mulf %100, %104 : vector<128x1xf32>
      %106 = arith.subf %105, %99 : vector<128x1xf32>
      %cst_63 = arith.constant -1.000000e+00 : f32
      %107 = vector.broadcast %cst_63 : f32 to vector<128x1xf32>
      %108 = arith.mulf %107, %106 : vector<128x1xf32>
      %cst_64 = arith.constant 0.000000e+00 : f32
      %109 = vector.broadcast %cst_64 : f32 to vector<128x1xf32>
      %110 = arith.maximumf %108, %109 : vector<128x1xf32>
      %111 = math.absf %108 : vector<128x1xf32>
      %cst_65 = arith.constant 0.000000e+00 : f32
      %112 = vector.broadcast %cst_65 : f32 to vector<128x1xf32>
      %113 = arith.subf %112, %111 : vector<128x1xf32>
      %114 = math.exp %113 : vector<128x1xf32>
      %115 = math.log1p %114 : vector<128x1xf32>
      %116 = arith.addf %110, %115 : vector<128x1xf32>
      %117 = tpu.iota {dimensions = array<i32: 0>} : vector<128x1xi32>
      %c128_i32_66 = arith.constant 128 : i32
      %118 = arith.muli %arg0, %c128_i32_66 : i32
      %119 = vector.broadcast %118 : i32 to vector<128x1xi32>
      %120 = arith.addi %117, %119 : vector<128x1xi32>
      %c8_i32_67 = arith.constant 8 : i32
      %121 = vector.broadcast %c8_i32_67 : i32 to vector<128x1xi32>
      %122 = arith.cmpi slt, %120, %121 : vector<128x1xi32>
      %123 = arith.extui %122 : vector<128x1xi1> to vector<128x1xi32>
      %124 = arith.sitofp %123 : vector<128x1xi32> to vector<128x1xf32>
      %c0_68 = arith.constant 0 : index
      %c0_69 = arith.constant 0 : index
      %125 = vector.load %arg8[%c0_68, %c0_69] : memref<128x1xf32, #tpu.memory_space<vmem>>, vector<128x1xf32>
      %126 = arith.mulf %125, %116 : vector<128x1xf32>
      %127 = arith.mulf %126, %124 : vector<128x1xf32>
      %cst_70 = arith.constant dense<0.000000e+00> : vector<1xf32>
      %128 = vector.multi_reduction <add>, %127, %cst_70 [0] : vector<128x1xf32> to vector<1xf32>
      %129 = vector.shape_cast %128 : vector<1xf32> to vector<1x1xf32>
      %130 = arith.cmpf oge, %105, %99 : vector<128x1xf32>
      %131 = arith.extui %130 : vector<128x1xi1> to vector<128x1xi32>
      %132 = arith.sitofp %131 : vector<128x1xi32> to vector<128x1xf32>
      %133 = arith.mulf %132, %124 : vector<128x1xf32>
      %cst_71 = arith.constant dense<0.000000e+00> : vector<1xf32>
      %134 = vector.multi_reduction <add>, %133, %cst_71 [0] : vector<128x1xf32> to vector<1xf32>
      %135 = vector.shape_cast %134 : vector<1xf32> to vector<1x1xf32>
      %136 = vector.shape_cast %129 : vector<1x1xf32> to vector<1x1xf32>
      %137 = vector.broadcast %136 : vector<1x1xf32> to vector<8x128xf32>
      %c0_72 = arith.constant 0 : index
      %c0_73 = arith.constant 0 : index
      %138 = vector.load %arg9[%c0_72, %c0_73] : memref<8x128xf32, #tpu.memory_space<vmem>>, vector<8x128xf32>
      tpu.vector_store %arg9[%c0_72, %c0_73], %137 {strides = array<i32>} : memref<8x128xf32, #tpu.memory_space<vmem>>, vector<8x128xf32>,
      %139 = vector.shape_cast %135 : vector<1x1xf32> to vector<1x1xf32>
      %140 = vector.broadcast %139 : vector<1x1xf32> to vector<8x128xf32>
      %c0_74 = arith.constant 0 : index
      %c0_75 = arith.constant 0 : index
      %141 = vector.load %arg10[%c0_74, %c0_75] : memref<8x128xf32, #tpu.memory_space<vmem>>, vector<8x128xf32>
      tpu.vector_store %arg10[%c0_74, %c0_75], %140 {strides = array<i32>} : memref<8x128xf32, #tpu.memory_space<vmem>>, vector<8x128xf32>,
    } else {
    }
    return
  }
  func.func @transform_0(%arg0: i32, %arg1: i32) -> (i32, i32) {
    %c0_i32 = arith.constant 0 : i32
    %c0_i32_0 = arith.constant 0 : i32
    return %arg0, %c0_i32 : i32, i32
  }
  func.func @transform_1(%arg0: i32, %arg1: i32) -> (i32, i32) {
    %c0_i32 = arith.constant 0 : i32
    %c0_i32_0 = arith.constant 0 : i32
    return %arg1, %c0_i32 : i32, i32
  }
  func.func @transform_2(%arg0: i32, %arg1: i32) -> (i32, i32) {
    %c0_i32 = arith.constant 0 : i32
    %c0_i32_0 = arith.constant 0 : i32
    return %arg0, %c0_i32 : i32, i32
  }
  func.func @transform_3(%arg0: i32, %arg1: i32) -> (i32, i32) {
    %c0_i32 = arith.constant 0 : i32
    %c0_i32_0 = arith.constant 0 : i32
    return %c0_i32, %arg1 : i32, i32
  }
  func.func @transform_4(%arg0: i32, %arg1: i32) -> (i32, i32) {
    %c0_i32 = arith.constant 0 : i32
    %c0_i32_0 = arith.constant 0 : i32
    return %arg0, %c0_i32 : i32, i32
  }
  func.func @transform_5(%arg0: i32, %arg1: i32) -> (i32, i32) {
    %c0_i32 = arith.constant 0 : i32
    %c0_i32_0 = arith.constant 0 : i32
    return %c0_i32, %arg1 : i32, i32
  }
  func.func @transform_6(%arg0: i32, %arg1: i32) -> (i32, i32) {
    %c0_i32 = arith.constant 0 : i32
    %c0_i32_0 = arith.constant 0 : i32
    return %arg0, %c0_i32 : i32, i32
  }
  func.func @transform_7(%arg0: i32, %arg1: i32) -> (i32, i32) {
    %c0_i32 = arith.constant 0 : i32
    %c0_i32_0 = arith.constant 0 : i32
    return %arg0, %c0_i32 : i32, i32
  }
  func.func @transform_8(%arg0: i32, %arg1: i32) -> (i32, i32) {
    %c0_i32 = arith.constant 0 : i32
    %c0_i32_0 = arith.constant 0 : i32
    return %arg0, %c0_i32 : i32, i32
  }
}

</mosaic_0001>

<llo_original>
// kernel: tpu_custom_call.1
$region0: #{tpu_custom_call.1}
  #allocation0 [shape = 'u32[]', space=smem, size = 0x4, offset = 0x4, fixed_abs, tag = 'smem constant byte address 0x4 - core index']
  #allocation1 [shape = 'u32[144,128]{1,0:T(1,128)}', space=vmem, size = 0x12000, scoped, tag = 'internal scratch']
  #allocation2 [shape = 'f32[128,1]{1,0:T(8,128)}', space=vmem, size = 0x10000, scoped, tag = 'scratch operand']
  #allocation3 [shape = 'f32[128,1]{1,0:T(8,128)}', space=vmem, size = 0x10000, scoped, tag = 'scratch operand']
  #allocation4 [shape = 'f32[128,1]{1,0:T(8,128)}', space=vmem, size = 0x10000, scoped, tag = 'scratch operand']
  #allocation5 [shape = 'f32[128,1]{1,0:T(8,128)}', space=vmem, size = 0x10000, scoped, tag = 'scratch operand']
  #allocation6 [shape = 'f32[128,1]{1,0:T(8,128)}', space=vmem, size = 0x10000, scoped, tag = 'scratch operand']
  #allocation7 [shape = 'f32[128,1]{1,0:T(8,128)}', space=vmem, size = 0x10000, scoped, tag = 'scratch operand']
  %s0 = inlined_call_operand.vmem [shape: f32[128,128], index: 0, kind: input, shape index: {}]
  %s1 = inlined_call_operand.vmem [shape: f32[128,128], index: 1, kind: input, shape index: {}]
  %s2 = inlined_call_operand.vmem [shape: f32[128,1], index: 2, kind: input, shape index: {}]
  %s3 = inlined_call_operand.vmem [shape: f32[1,128], index: 3, kind: input, shape index: {}]
  %s4 = inlined_call_operand.vmem [shape: s32[128,1], index: 4, kind: input, shape index: {}]
  %s5 = inlined_call_operand.vmem [shape: s32[1,128], index: 5, kind: input, shape index: {}]
  %s6 = inlined_call_operand.vmem [shape: f32[128,1], index: 6, kind: input, shape index: {}]
  %s7 = inlined_call_operand.hbm [shape: f32[8,128], index: 7, kind: output, shape index: {0}]
  %s8 = inlined_call_operand.hbm [shape: f32[8,128], index: 8, kind: output, shape index: {1}]
  %9 = xla_tuple %s7, %s8
  %s10 = sld [smem:[#allocation0]]
  $region54: #{tpu_custom_call.1} parent=0
    _
  %s12 = ssub.s32 1, %s10
  %s13 = scalar_select 0, %s12, %s10
  $region1: #{tpu_custom_call.1} parent=0
    #allocation8 [shape = 'u8[4096]{0}', space=vmem, size = 0x1000, scoped, tag = 'output window, operand 0, single buffered']
    #allocation9 [shape = 's32[1]{0}', space=sflag, size = 0x4, scoped, tag = 'scoped memory for tpu_custom_call.1']
    #allocation10 [shape = 'u8[4096]{0}', space=vmem, size = 0x1000, scoped, tag = 'output window, operand 1, single buffered']
    #allocation11 [shape = 's32[1]{0}', space=sflag, size = 0x4, scoped, tag = 'scoped memory for tpu_custom_call.1']
    %14 = vsyncpa [#allocation9], 0
    %15 = vsyncpa [#allocation11], 0
    // Predicated region
    $region2: #{tpu_custom_call.1} parent=1 // pred_check
      _
    $region3: #{tpu_custom_call.1} parent=1 // pred_check_branch
      %17 = sbr.rel (0) target = $region5
    $region4: #{tpu_custom_call.1} parent=1 // pred_region
      _
    $region5: #{tpu_custom_call.1} parent=1 // pred_fallthru
      _
    // Predicated region
    $region6: #{tpu_custom_call.1} parent=1 // pred_check
      _
    $region7: #{tpu_custom_call.1} parent=1 // pred_check_branch
      %19 = sbr.rel (0) target = $region9
    $region8: #{tpu_custom_call.1} parent=1 // pred_region
      _
    $region9: #{tpu_custom_call.1} parent=1 // pred_fallthru
      _
    // Predicated region
    $region10: #{tpu_custom_call.1} parent=1 // pred_check
      _
    $region11: #{tpu_custom_call.1} parent=1 // pred_check_branch
      %21 = sbr.rel (0) target = $region13
    $region12: #{tpu_custom_call.1} parent=1 // pred_region
      _
    $region13: #{tpu_custom_call.1} parent=1 // pred_fallthru
      _
    // Predicated region
    $region14: #{tpu_custom_call.1} parent=1 // pred_check
      _
    $region15: #{tpu_custom_call.1} parent=1 // pred_check_branch
      %23 = sbr.rel (0) target = $region17
    $region16: #{tpu_custom_call.1} parent=1 // pred_region
      _
    $region17: #{tpu_custom_call.1} parent=1 // pred_fallthru
      _
    // Predicated region
    $region18: #{tpu_custom_call.1} parent=1 // pred_check
      _
    $region19: #{tpu_custom_call.1} parent=1 // pred_check_branch
      %25 = sbr.rel (0) target = $region21
    $region20: #{tpu_custom_call.1} parent=1 // pred_region
      _
    $region21: #{tpu_custom_call.1} parent=1 // pred_fallthru
      _
    // Predicated region
    $region22: #{tpu_custom_call.1} parent=1 // pred_check
      _
    $region23: #{tpu_custom_call.1} parent=1 // pred_check_branch
      %27 = sbr.rel (0) target = $region25
    $region24: #{tpu_custom_call.1} parent=1 // pred_region
      _
    $region25: #{tpu_custom_call.1} parent=1 // pred_fallthru
      _
    // Predicated region
    $region26: #{tpu_custom_call.1} parent=1 // pred_check
      _
    $region27: #{tpu_custom_call.1} parent=1 // pred_check_branch
      %29 = sbr.rel (0) target = $region29
    $region28: #{tpu_custom_call.1} parent=1 // pred_region
      _
    $region29: #{tpu_custom_call.1} parent=1 // pred_fallthru
      _
    %p30 = scmp.eq.s32.totalorder 0, 0
    // Predicated region
    $region30: #{tpu_custom_call.1} parent=1 // pred_check
      %p31 = pneg %p30
    $region31: #{tpu_custom_call.1} parent=1 // pred_check_branch
      %33 = sbr.rel (%p31) target = $region33
    $region32: #{tpu_custom_call.1} parent=1 // pred_region
      %vm34 = vcmask 7168
      %35 = vst.msk [vmem:[#allocation2] sm:$0xff] %vm34, -inf
      %36 = vst.msk [vmem:[#allocation2 + $0x8] sm:$0xff] %vm34, -inf
      %37 = vst.msk [vmem:[#allocation2 + $0x10] sm:$0xff] %vm34, -inf
      %38 = vst.msk [vmem:[#allocation2 + $0x18] sm:$0xff] %vm34, -inf
      %39 = vst.msk [vmem:[#allocation2 + $0x20] sm:$0xff] %vm34, -inf
      %40 = vst.msk [vmem:[#allocation2 + $0x28] sm:$0xff] %vm34, -inf
      %41 = vst.msk [vmem:[#allocation2 + $0x30] sm:$0xff] %vm34, -inf
      %42 = vst.msk [vmem:[#allocation2 + $0x38] sm:$0xff] %vm34, -inf
      %43 = vst.msk [vmem:[#allocation2 + $0x40] sm:$0xff] %vm34, -inf
      %44 = vst.msk [vmem:[#allocation2 + $0x48] sm:$0xff] %vm34, -inf
      %45 = vst.msk [vmem:[#allocation2 + $0x50] sm:$0xff] %vm34, -inf
      %46 = vst.msk [vmem:[#allocation2 + $0x58] sm:$0xff] %vm34, -inf
      %47 = vst.msk [vmem:[#allocation2 + $0x60] sm:$0xff] %vm34, -inf
      %48 = vst.msk [vmem:[#allocation2 + $0x68] sm:$0xff] %vm34, -inf
      %49 = vst.msk [vmem:[#allocation2 + $0x70] sm:$0xff] %vm34, -inf
      %50 = vst.msk [vmem:[#allocation2 + $0x78] sm:$0xff] %vm34, -inf
      %51 = vst.msk [vmem:[#allocation5] sm:$0xff] %vm34, -inf
      %52 = vst.msk [vmem:[#allocation5 + $0x8] sm:$0xff] %vm34, -inf
      %53 = vst.msk [vmem:[#allocation5 + $0x10] sm:$0xff] %vm34, -inf
      %54 = vst.msk [vmem:[#allocation5 + $0x18] sm:$0xff] %vm34, -inf
      %55 = vst.msk [vmem:[#allocation5 + $0x20] sm:$0xff] %vm34, -inf
      %56 = vst.msk [vmem:[#allocation5 + $0x28] sm:$0xff] %vm34, -inf
      %57 = vst.msk [vmem:[#allocation5 + $0x30] sm:$0xff] %vm34, -inf
      %58 = vst.msk [vmem:[#allocation5 + $0x38] sm:$0xff] %vm34, -inf
      %59 = vst.msk [vmem:[#allocation5 + $0x40] sm:$0xff] %vm34, -inf
      %60 = vst.msk [vmem:[#allocation5 + $0x48] sm:$0xff] %vm34, -inf
      %61 = vst.msk [vmem:[#allocation5 + $0x50] sm:$0xff] %vm34, -inf
      %62 = vst.msk [vmem:[#allocation5 + $0x58] sm:$0xff] %vm34, -inf
      %63 = vst.msk [vmem:[#allocation5 + $0x60] sm:$0xff] %vm34, -inf
      %64 = vst.msk [vmem:[#allocation5 + $0x68] sm:$0xff] %vm34, -inf
      %65 = vst.msk [vmem:[#allocation5 + $0x70] sm:$0xff] %vm34, -inf
      %66 = vst.msk [vmem:[#allocation5 + $0x78] sm:$0xff] %vm34, -inf
      %67 = vst.msk [vmem:[#allocation3] sm:$0xff] %vm34, 0.0
      %68 = vst.msk [vmem:[#allocation3 + $0x8] sm:$0xff] %vm34, 0.0
      %69 = vst.msk [vmem:[#allocation3 + $0x10] sm:$0xff] %vm34, 0.0
      %70 = vst.msk [vmem:[#allocation3 + $0x18] sm:$0xff] %vm34, 0.0
      %71 = vst.msk [vmem:[#allocation3 + $0x20] sm:$0xff] %vm34, 0.0
      %72 = vst.msk [vmem:[#allocation3 + $0x28] sm:$0xff] %vm34, 0.0
      %73 = vst.msk [vmem:[#allocation3 + $0x30] sm:$0xff] %vm34, 0.0
      %74 = vst.msk [vmem:[#allocation3 + $0x38] sm:$0xff] %vm34, 0.0
      %75 = vst.msk [vmem:[#allocation3 + $0x40] sm:$0xff] %vm34, 0.0
      %76 = vst.msk [vmem:[#allocation3 + $0x48] sm:$0xff] %vm34, 0.0
      %77 = vst.msk [vmem:[#allocation3 + $0x50] sm:$0xff] %vm34, 0.0
      %78 = vst.msk [vmem:[#allocation3 + $0x58] sm:$0xff] %vm34, 0.0
      %79 = vst.msk [vmem:[#allocation3 + $0x60] sm:$0xff] %vm34, 0.0
      %80 = vst.msk [vmem:[#allocation3 + $0x68] sm:$0xff] %vm34, 0.0
      %81 = vst.msk [vmem:[#allocation3 + $0x70] sm:$0xff] %vm34, 0.0
      %82 = vst.msk [vmem:[#allocation3 + $0x78] sm:$0xff] %vm34, 0.0
      %83 = vst.msk [vmem:[#allocation6] sm:$0xff] %vm34, 0.0
      %84 = vst.msk [vmem:[#allocation6 + $0x8] sm:$0xff] %vm34, 0.0
      %85 = vst.msk [vmem:[#allocation6 + $0x10] sm:$0xff] %vm34, 0.0
      %86 = vst.msk [vmem:[#allocation6 + $0x18] sm:$0xff] %vm34, 0.0
      %87 = vst.msk [vmem:[#allocation6 + $0x20] sm:$0xff] %vm34, 0.0
      %88 = vst.msk [vmem:[#allocation6 + $0x28] sm:$0xff] %vm34, 0.0
      %89 = vst.msk [vmem:[#allocation6 + $0x30] sm:$0xff] %vm34, 0.0
      %90 = vst.msk [vmem:[#allocation6 + $0x38] sm:$0xff] %vm34, 0.0
      %91 = vst.msk [vmem:[#allocation6 + $0x40] sm:$0xff] %vm34, 0.0
      %92 = vst.msk [vmem:[#allocation6 + $0x48] sm:$0xff] %vm34, 0.0
      %93 = vst.msk [vmem:[#allocation6 + $0x50] sm:$0xff] %vm34, 0.0
      %94 = vst.msk [vmem:[#allocation6 + $0x58] sm:$0xff] %vm34, 0.0
      %95 = vst.msk [vmem:[#allocation6 + $0x60] sm:$0xff] %vm34, 0.0
      %96 = vst.msk [vmem:[#allocation6 + $0x68] sm:$0xff] %vm34, 0.0
      %97 = vst.msk [vmem:[#allocation6 + $0x70] sm:$0xff] %vm34, 0.0
      %98 = vst.msk [vmem:[#allocation6 + $0x78] sm:$0xff] %vm34, 0.0
      %99 = vst.msk [vmem:[#allocation4] sm:$0xff] %vm34, 0.0
      %100 = vst.msk [vmem:[#allocation4 + $0x8] sm:$0xff] %vm34, 0.0
      %101 = vst.msk [vmem:[#allocation4 + $0x10] sm:$0xff] %vm34, 0.0
      %102 = vst.msk [vmem:[#allocation4 + $0x18] sm:$0xff] %vm34, 0.0
      %103 = vst.msk [vmem:[#allocation4 + $0x20] sm:$0xff] %vm34, 0.0
      %104 = vst.msk [vmem:[#allocation4 + $0x28] sm:$0xff] %vm34, 0.0
      %105 = vst.msk [vmem:[#allocation4 + $0x30] sm:$0xff] %vm34, 0.0
      %106 = vst.msk [vmem:[#allocation4 + $0x38] sm:$0xff] %vm34, 0.0
      %107 = vst.msk [vmem:[#allocation4 + $0x40] sm:$0xff] %vm34, 0.0
      %108 = vst.msk [vmem:[#allocation4 + $0x48] sm:$0xff] %vm34, 0.0
      %109 = vst.msk [vmem:[#allocation4 + $0x50] sm:$0xff] %vm34, 0.0
      %110 = vst.msk [vmem:[#allocation4 + $0x58] sm:$0xff] %vm34, 0.0
      %111 = vst.msk [vmem:[#allocation4 + $0x60] sm:$0xff] %vm34, 0.0
      %112 = vst.msk [vmem:[#allocation4 + $0x68] sm:$0xff] %vm34, 0.0
      %113 = vst.msk [vmem:[#allocation4 + $0x70] sm:$0xff] %vm34, 0.0
      %114 = vst.msk [vmem:[#allocation4 + $0x78] sm:$0xff] %vm34, 0.0
      %115 = vst.msk [vmem:[#allocation7] sm:$0xff] %vm34, 0.0
      %116 = vst.msk [vmem:[#allocation7 + $0x8] sm:$0xff] %vm34, 0.0
      %117 = vst.msk [vmem:[#allocation7 + $0x10] sm:$0xff] %vm34, 0.0
      %118 = vst.msk [vmem:[#allocation7 + $0x18] sm:$0xff] %vm34, 0.0
      %119 = vst.msk [vmem:[#allocation7 + $0x20] sm:$0xff] %vm34, 0.0
      %120 = vst.msk [vmem:[#allocation7 + $0x28] sm:$0xff] %vm34, 0.0
      %121 = vst.msk [vmem:[#allocation7 + $0x30] sm:$0xff] %vm34, 0.0
      %122 = vst.msk [vmem:[#allocation7 + $0x38] sm:$0xff] %vm34, 0.0
      %123 = vst.msk [vmem:[#allocation7 + $0x40] sm:$0xff] %vm34, 0.0
      %124 = vst.msk [vmem:[#allocation7 + $0x48] sm:$0xff] %vm34, 0.0
      %125 = vst.msk [vmem:[#allocation7 + $0x50] sm:$0xff] %vm34, 0.0
      %126 = vst.msk [vmem:[#allocation7 + $0x58] sm:$0xff] %vm34, 0.0
      %127 = vst.msk [vmem:[#allocation7 + $0x60] sm:$0xff] %vm34, 0.0
      %128 = vst.msk [vmem:[#allocation7 + $0x68] sm:$0xff] %vm34, 0.0
      %129 = vst.msk [vmem:[#allocation7 + $0x70] sm:$0xff] %vm34, 0.0
      %130 = vst.msk [vmem:[#allocation7 + $0x78] sm:$0xff] %vm34, 0.0
    $region33: #{tpu_custom_call.1} parent=1 // pred_fallthru
      _
    %v131 = vld [vmem:[%s0] sm:$0xff]
    %v132 = vld [vmem:[%s0 + $0x8] sm:$0xff]
    %v133 = vld [vmem:[%s0 + $0x10] sm:$0xff]
    %v134 = vld [vmem:[%s0 + $0x18] sm:$0xff]
    %v135 = vld [vmem:[%s0 + $0x20] sm:$0xff]
    %v136 = vld [vmem:[%s0 + $0x28] sm:$0xff]
    %v137 = vld [vmem:[%s0 + $0x30] sm:$0xff]
    %v138 = vld [vmem:[%s0 + $0x38] sm:$0xff]
    %v139 = vld [vmem:[%s0 + $0x40] sm:$0xff]
    %v140 = vld [vmem:[%s0 + $0x48] sm:$0xff]
    %v141 = vld [vmem:[%s0 + $0x50] sm:$0xff]
    %v142 = vld [vmem:[%s0 + $0x58] sm:$0xff]
    %v143 = vld [vmem:[%s0 + $0x60] sm:$0xff]
    %v144 = vld [vmem:[%s0 + $0x68] sm:$0xff]
    %v145 = vld [vmem:[%s0 + $0x70] sm:$0xff]
    %v146 = vld [vmem:[%s0 + $0x78] sm:$0xff]
    %v147 = vld [vmem:[%s1] sm:$0xff]
    %v148 = vld [vmem:[%s1 + $0x8] sm:$0xff]
    %v149 = vld [vmem:[%s1 + $0x10] sm:$0xff]
    %v150 = vld [vmem:[%s1 + $0x18] sm:$0xff]
    %v151 = vld [vmem:[%s1 + $0x20] sm:$0xff]
    %v152 = vld [vmem:[%s1 + $0x28] sm:$0xff]
    %v153 = vld [vmem:[%s1 + $0x30] sm:$0xff]
    %v154 = vld [vmem:[%s1 + $0x38] sm:$0xff]
    %v155 = vld [vmem:[%s1 + $0x40] sm:$0xff]
    %v156 = vld [vmem:[%s1 + $0x48] sm:$0xff]
    %v157 = vld [vmem:[%s1 + $0x50] sm:$0xff]
    %v158 = vld [vmem:[%s1 + $0x58] sm:$0xff]
    %v159 = vld [vmem:[%s1 + $0x60] sm:$0xff]
    %v160 = vld [vmem:[%s1 + $0x68] sm:$0xff]
    %v161 = vld [vmem:[%s1 + $0x70] sm:$0xff]
    %v162 = vld [vmem:[%s1 + $0x78] sm:$0xff]
    %163 = vmatprep.subr.mxu0 0.0
    %164 = vmatpush1.xpose.msra.mxu0 %v147
    %165 = vmatprep.subr.mxu0 0.0
    %166 = vmatpush1.xpose.msra.mxu0 %v148
    %167 = vmatprep.subr.mxu0 0.0
    %168 = vmatpush1.xpose.msra.mxu0 %v149
    %169 = vmatprep.subr.mxu0 0.0
    %170 = vmatpush1.xpose.msra.mxu0 %v150
    %171 = vmatprep.subr.mxu0 0.0
    %172 = vmatpush1.xpose.msra.mxu0 %v151
    %173 = vmatprep.subr.mxu0 0.0
    %174 = vmatpush1.xpose.msra.mxu0 %v152
    %175 = vmatprep.subr.mxu0 0.0
    %176 = vmatpush1.xpose.msra.mxu0 %v153
    %177 = vmatprep.subr.mxu0 0.0
    %178 = vmatpush1.xpose.msra.mxu0 %v154
    %179 = vmatprep.subr.mxu0 0.0
    %180 = vmatpush1.xpose.msra.mxu0 %v155
    %181 = vmatprep.subr.mxu0 0.0
    %182 = vmatpush1.xpose.msra.mxu0 %v156
    %183 = vmatprep.subr.mxu0 0.0
    %184 = vmatpush1.xpose.msra.mxu0 %v157
    %185 = vmatprep.subr.mxu0 0.0
    %186 = vmatpush1.xpose.msra.mxu0 %v158
    %187 = vmatprep.subr.mxu0 0.0
    %188 = vmatpush1.xpose.msra.mxu0 %v159
    %189 = vmatprep.subr.mxu0 0.0
    %190 = vmatpush1.xpose.msra.mxu0 %v160
    %191 = vmatprep.subr.mxu0 0.0
    %192 = vmatpush1.xpose.msra.mxu0 %v161
    %193 = vmatprep.subr.mxu0 0.0
    %194 = vmatpush1.xpose.msra.mxu0 %v162
    %195 = vmatprep.subr.mxu0 0.0
    %196 = vmatpush1.xpose.msra.mxu0 0.0
    %197 = vmatprep.subr.mxu0 0.0
    %198 = vmatpush1.xpose.msra.mxu0 0.0
    %199 = vmatprep.subr.mxu0 0.0
    %200 = vmatpush1.xpose.msra.mxu0 0.0
    %201 = vmatprep.subr.mxu0 0.0
    %202 = vmatpush1.xpose.msra.mxu0 0.0
    %203 = vmatprep.subr.mxu0 0.0
    %204 = vmatpush1.xpose.msra.mxu0 0.0
    %205 = vmatprep.subr.mxu0 0.0
    %206 = vmatpush1.xpose.msra.mxu0 0.0
    %207 = vmatprep.subr.mxu0 0.0
    %208 = vmatpush1.xpose.msra.mxu0 0.0
    %209 = vmatprep.subr.mxu0 0.0
    %210 = vmatpush1.xpose.msra.mxu0 0.0
    %211 = vmatprep.subr.mxu0 0.0
    %212 = vmatpush1.xpose.msra.mxu0 0.0
    %213 = vmatprep.subr.mxu0 0.0
    %214 = vmatpush1.xpose.msra.mxu0 0.0
    %215 = vmatprep.subr.mxu0 0.0
    %216 = vmatpush1.xpose.msra.mxu0 0.0
    %217 = vmatprep.subr.mxu0 0.0
    %218 = vmatpush1.xpose.msra.mxu0 0.0
    %219 = vmatprep.subr.mxu0 0.0
    %220 = vmatpush1.xpose.msra.mxu0 0.0
    %221 = vmatprep.subr.mxu0 0.0
    %222 = vmatpush1.xpose.msra.mxu0 0.0
    %223 = vmatprep.subr.mxu0 0.0
    %224 = vmatpush1.xpose.msra.mxu0 0.0
    %225 = vmatprep.subr.mxu0 0.0
    %226 = vmatpush1.xpose.msra.mxu0 0.0
    %227 = vmatprep.mubr.f32.mxu0 0.0
    %228 = vmatmul.mubr.f32.gmra.mrb[0].mxu0 %v131
    %v229 = vpop.f32.mrb[0].mxu0
    %v230 = vadd.f32 0.0, %v229
    %v231 = vpop.f32.mrb[0].mxu0
    %232 = vmatprep.mubr.f32.mxu0 0.0
    %233 = vmatmul.mubr.f32.gmra.mrb[0].mxu0 %v132
    %v234 = vpop.f32.mrb[0].mxu0
    %v235 = vadd.f32 0.0, %v234
    %v236 = vpop.f32.mrb[0].mxu0
    %237 = vmatprep.mubr.f32.mxu0 0.0
    %238 = vmatmul.mubr.f32.gmra.mrb[0].mxu0 %v133
    %v239 = vpop.f32.mrb[0].mxu0
    %v240 = vadd.f32 0.0, %v239
    %v241 = vpop.f32.mrb[0].mxu0
    %242 = vmatprep.mubr.f32.mxu0 0.0
    %243 = vmatmul.mubr.f32.gmra.mrb[0].mxu0 %v134
    %v244 = vpop.f32.mrb[0].mxu0
    %v245 = vadd.f32 0.0, %v244
    %v246 = vpop.f32.mrb[0].mxu0
    %247 = vmatprep.mubr.f32.mxu0 0.0
    %248 = vmatmul.mubr.f32.gmra.mrb[0].mxu0 %v135
    %v249 = vpop.f32.mrb[0].mxu0
    %v250 = vadd.f32 0.0, %v249
    %v251 = vpop.f32.mrb[0].mxu0
    %252 = vmatprep.mubr.f32.mxu0 0.0
    %253 = vmatmul.mubr.f32.gmra.mrb[0].mxu0 %v136
    %v254 = vpop.f32.mrb[0].mxu0
    %v255 = vadd.f32 0.0, %v254
    %v256 = vpop.f32.mrb[0].mxu0
    %257 = vmatprep.mubr.f32.mxu0 0.0
    %258 = vmatmul.mubr.f32.gmra.mrb[0].mxu0 %v137
    %v259 = vpop.f32.mrb[0].mxu0
    %v260 = vadd.f32 0.0, %v259
    %v261 = vpop.f32.mrb[0].mxu0
    %262 = vmatprep.mubr.f32.mxu0 0.0
    %263 = vmatmul.mubr.f32.gmra.mrb[0].mxu0 %v138
    %v264 = vpop.f32.mrb[0].mxu0
    %v265 = vadd.f32 0.0, %v264
    %v266 = vpop.f32.mrb[0].mxu0
    %267 = vmatprep.mubr.f32.mxu0 0.0
    %268 = vmatmul.mubr.f32.gmra.mrb[0].mxu0 %v139
    %v269 = vpop.f32.mrb[0].mxu0
    %v270 = vadd.f32 0.0, %v269
    %v271 = vpop.f32.mrb[0].mxu0
    %272 = vmatprep.mubr.f32.mxu0 0.0
    %273 = vmatmul.mubr.f32.gmra.mrb[0].mxu0 %v140
    %v274 = vpop.f32.mrb[0].mxu0
    %v275 = vadd.f32 0.0, %v274
    %v276 = vpop.f32.mrb[0].mxu0
    %277 = vmatprep.mubr.f32.mxu0 0.0
    %278 = vmatmul.mubr.f32.gmra.mrb[0].mxu0 %v141
    %v279 = vpop.f32.mrb[0].mxu0
    %v280 = vadd.f32 0.0, %v279
    %v281 = vpop.f32.mrb[0].mxu0
    %282 = vmatprep.mubr.f32.mxu0 0.0
    %283 = vmatmul.mubr.f32.gmra.mrb[0].mxu0 %v142
    %v284 = vpop.f32.mrb[0].mxu0
    %v285 = vadd.f32 0.0, %v284
    %v286 = vpop.f32.mrb[0].mxu0
    %287 = vmatprep.mubr.f32.mxu0 0.0
    %288 = vmatmul.mubr.f32.gmra.mrb[0].mxu0 %v143
    %v289 = vpop.f32.mrb[0].mxu0
    %v290 = vadd.f32 0.0, %v289
    %v291 = vpop.f32.mrb[0].mxu0
    %292 = vmatprep.mubr.f32.mxu0 0.0
    %293 = vmatmul.mubr.f32.gmra.mrb[0].mxu0 %v144
    %v294 = vpop.f32.mrb[0].mxu0
    %v295 = vadd.f32 0.0, %v294
    %v296 = vpop.f32.mrb[0].mxu0
    %297 = vmatprep.mubr.f32.mxu0 0.0
    %298 = vmatmul.mubr.f32.gmra.mrb[0].mxu0 %v145
    %v299 = vpop.f32.mrb[0].mxu0
    %v300 = vadd.f32 0.0, %v299
    %v301 = vpop.f32.mrb[0].mxu0
    %302 = vmatprep.mubr.f32.mxu0 0.0
    %303 = vmatmul.mubr.f32.gmra.mrb[0].mxu0 %v146
    %v304 = vpop.f32.mrb[0].mxu0
    %v305 = vadd.f32 0.0, %v304
    %v306 = vpop.f32.mrb[0].mxu0
    %307 = vdwg.mxu0
    %v308 = vld [vmem:[%s2] sm:$0xff]
    %v309 = vld [vmem:[%s2 + $0x8] sm:$0xff]
    %v310 = vld [vmem:[%s2 + $0x10] sm:$0xff]
    %v311 = vld [vmem:[%s2 + $0x18] sm:$0xff]
    %v312 = vld [vmem:[%s2 + $0x20] sm:$0xff]
    %v313 = vld [vmem:[%s2 + $0x28] sm:$0xff]
    %v314 = vld [vmem:[%s2 + $0x30] sm:$0xff]
    %v315 = vld [vmem:[%s2 + $0x38] sm:$0xff]
    %v316 = vld [vmem:[%s2 + $0x40] sm:$0xff]
    %v317 = vld [vmem:[%s2 + $0x48] sm:$0xff]
    %v318 = vld [vmem:[%s2 + $0x50] sm:$0xff]
    %v319 = vld [vmem:[%s2 + $0x58] sm:$0xff]
    %v320 = vld [vmem:[%s2 + $0x60] sm:$0xff]
    %v321 = vld [vmem:[%s2 + $0x68] sm:$0xff]
    %v322 = vld [vmem:[%s2 + $0x70] sm:$0xff]
    %v323 = vld [vmem:[%s2 + $0x78] sm:$0xff]
    %v324 = vld [vmem:[%s3] sm:$0x1]
    %326 = vset.pattern.permute.xlu0 0
    %327 = vperm.xlu0 %326, %v308
    %v328 = vpop.permute.xlu0 %327
    %331 = vset.pattern.permute.xlu0 0
    %332 = vperm.xlu0 %331, %v309
    %v333 = vpop.permute.xlu0 %332
    %336 = vset.pattern.permute.xlu0 0
    %337 = vperm.xlu0 %336, %v310
    %v338 = vpop.permute.xlu0 %337
    %341 = vset.pattern.permute.xlu0 0
    %342 = vperm.xlu0 %341, %v311
    %v343 = vpop.permute.xlu0 %342
    %346 = vset.pattern.permute.xlu0 0
    %347 = vperm.xlu0 %346, %v312
    %v348 = vpop.permute.xlu0 %347
    %351 = vset.pattern.permute.xlu0 0
    %352 = vperm.xlu0 %351, %v313
    %v353 = vpop.permute.xlu0 %352
    %356 = vset.pattern.permute.xlu0 0
    %357 = vperm.xlu0 %356, %v314
    %v358 = vpop.permute.xlu0 %357
    %361 = vset.pattern.permute.xlu0 0
    %362 = vperm.xlu0 %361, %v315
    %v363 = vpop.permute.xlu0 %362
    %366 = vset.pattern.permute.xlu0 0
    %367 = vperm.xlu0 %366, %v316
    %v368 = vpop.permute.xlu0 %367
    %371 = vset.pattern.permute.xlu0 0
    %372 = vperm.xlu0 %371, %v317
    %v373 = vpop.permute.xlu0 %372
    %376 = vset.pattern.permute.xlu0 0
    %377 = vperm.xlu0 %376, %v318
    %v378 = vpop.permute.xlu0 %377
    %381 = vset.pattern.permute.xlu0 0
    %382 = vperm.xlu0 %381, %v319
    %v383 = vpop.permute.xlu0 %382
    %386 = vset.pattern.permute.xlu0 0
    %387 = vperm.xlu0 %386, %v320
    %v388 = vpop.permute.xlu0 %387
    %391 = vset.pattern.permute.xlu0 0
    %392 = vperm.xlu0 %391, %v321
    %v393 = vpop.permute.xlu0 %392
    %396 = vset.pattern.permute.xlu0 0
    %397 = vperm.xlu0 %396, %v322
    %v398 = vpop.permute.xlu0 %397
    %401 = vset.pattern.permute.xlu0 0
    %402 = vperm.xlu0 %401, %v323
    %v403 = vpop.permute.xlu0 %402
    %v406 = vlaneseq
    %v407 = vshrl.u32 %v406, 7
    %v408 = vsub.s32 0, %v407
    %v409 = vrot.slane %v324, %v408
    %v411 = vadd.f32 %v328, %v409
    %v412 = vadd.f32 %v333, %v409
    %v413 = vadd.f32 %v338, %v409
    %v414 = vadd.f32 %v343, %v409
    %v415 = vadd.f32 %v348, %v409
    %v416 = vadd.f32 %v353, %v409
    %v417 = vadd.f32 %v358, %v409
    %v418 = vadd.f32 %v363, %v409
    %v419 = vadd.f32 %v368, %v409
    %v420 = vadd.f32 %v373, %v409
    %v421 = vadd.f32 %v378, %v409
    %v422 = vadd.f32 %v383, %v409
    %v423 = vadd.f32 %v388, %v409
    %v424 = vadd.f32 %v393, %v409
    %v425 = vadd.f32 %v398, %v409
    %v426 = vadd.f32 %v403, %v409
    %v427 = vmul.f32 %v230, 2.0
    %v428 = vmul.f32 %v235, 2.0
    %v429 = vmul.f32 %v240, 2.0
    %v430 = vmul.f32 %v245, 2.0
    %v431 = vmul.f32 %v250, 2.0
    %v432 = vmul.f32 %v255, 2.0
    %v433 = vmul.f32 %v260, 2.0
    %v434 = vmul.f32 %v265, 2.0
    %v435 = vmul.f32 %v270, 2.0
    %v436 = vmul.f32 %v275, 2.0
    %v437 = vmul.f32 %v280, 2.0
    %v438 = vmul.f32 %v285, 2.0
    %v439 = vmul.f32 %v290, 2.0
    %v440 = vmul.f32 %v295, 2.0
    %v441 = vmul.f32 %v300, 2.0
    %v442 = vmul.f32 %v305, 2.0
    %v443 = vsub.f32 %v411, %v427
    %v444 = vsub.f32 %v412, %v428
    %v445 = vsub.f32 %v413, %v429
    %v446 = vsub.f32 %v414, %v430
    %v447 = vsub.f32 %v415, %v431
    %v448 = vsub.f32 %v416, %v432
    %v449 = vsub.f32 %v417, %v433
    %v450 = vsub.f32 %v418, %v434
    %v451 = vsub.f32 %v419, %v435
    %v452 = vsub.f32 %v420, %v436
    %v453 = vsub.f32 %v421, %v437
    %v454 = vsub.f32 %v422, %v438
    %v455 = vsub.f32 %v423, %v439
    %v456 = vsub.f32 %v424, %v440
    %v457 = vsub.f32 %v425, %v441
    %v458 = vsub.f32 %v426, %v442
    %v459 = vmax.f32 %v443, 1e-12
    %v460 = vmax.f32 %v444, 1e-12
    %v461 = vmax.f32 %v445, 1e-12
    %v462 = vmax.f32 %v446, 1e-12
    %v463 = vmax.f32 %v447, 1e-12
    %v464 = vmax.f32 %v448, 1e-12
    %v465 = vmax.f32 %v449, 1e-12
    %v466 = vmax.f32 %v450, 1e-12
    %v467 = vmax.f32 %v451, 1e-12
    %v468 = vmax.f32 %v452, 1e-12
    %v469 = vmax.f32 %v453, 1e-12
    %v470 = vmax.f32 %v454, 1e-12
    %v471 = vmax.f32 %v455, 1e-12
    %v472 = vmax.f32 %v456, 1e-12
    %v473 = vmax.f32 %v457, 1e-12
    %v474 = vmax.f32 %v458, 1e-12
    %v475 = vrsqrt.pop %v459
    %v476 = vmul.f32 %v459, %v475
    %vm477 = vcmp.eq.f32.partialorder %v459, inf
    %v478 = vsel %vm477, %v459, %v476
    %vm479 = vcmp.eq.f32.partialorder %v459, 0.0
    %v480 = vand.u32 %v459, 2147483648
    %v481 = vsel %vm479, %v480, %v478
    %v482 = vrsqrt.pop %v460
    %v483 = vmul.f32 %v460, %v482
    %vm484 = vcmp.eq.f32.partialorder %v460, inf
    %v485 = vsel %vm484, %v460, %v483
    %vm486 = vcmp.eq.f32.partialorder %v460, 0.0
    %v487 = vand.u32 %v460, 2147483648
    %v488 = vsel %vm486, %v487, %v485
    %v489 = vrsqrt.pop %v461
    %v490 = vmul.f32 %v461, %v489
    %vm491 = vcmp.eq.f32.partialorder %v461, inf
    %v492 = vsel %vm491, %v461, %v490
    %vm493 = vcmp.eq.f32.partialorder %v461, 0.0
    %v494 = vand.u32 %v461, 2147483648
    %v495 = vsel %vm493, %v494, %v492
    %v496 = vrsqrt.pop %v462
    %v497 = vmul.f32 %v462, %v496
    %vm498 = vcmp.eq.f32.partialorder %v462, inf
    %v499 = vsel %vm498, %v462, %v497
    %vm500 = vcmp.eq.f32.partialorder %v462, 0.0
    %v501 = vand.u32 %v462, 2147483648
    %v502 = vsel %vm500, %v501, %v499
    %v503 = vrsqrt.pop %v463
    %v504 = vmul.f32 %v463, %v503
    %vm505 = vcmp.eq.f32.partialorder %v463, inf
    %v506 = vsel %vm505, %v463, %v504
    %vm507 = vcmp.eq.f32.partialorder %v463, 0.0
    %v508 = vand.u32 %v463, 2147483648
    %v509 = vsel %vm507, %v508, %v506
    %v510 = vrsqrt.pop %v464
    %v511 = vmul.f32 %v464, %v510
    %vm512 = vcmp.eq.f32.partialorder %v464, inf
    %v513 = vsel %vm512, %v464, %v511
    %vm514 = vcmp.eq.f32.partialorder %v464, 0.0
    %v515 = vand.u32 %v464, 2147483648
    %v516 = vsel %vm514, %v515, %v513
    %v517 = vrsqrt.pop %v465
    %v518 = vmul.f32 %v465, %v517
    %vm519 = vcmp.eq.f32.partialorder %v465, inf
    %v520 = vsel %vm519, %v465, %v518
    %vm521 = vcmp.eq.f32.partialorder %v465, 0.0
    %v522 = vand.u32 %v465, 2147483648
    %v523 = vsel %vm521, %v522, %v520
    %v524 = vrsqrt.pop %v466
    %v525 = vmul.f32 %v466, %v524
    %vm526 = vcmp.eq.f32.partialorder %v466, inf
    %v527 = vsel %vm526, %v466, %v525
    %vm528 = vcmp.eq.f32.partialorder %v466, 0.0
    %v529 = vand.u32 %v466, 2147483648
    %v530 = vsel %vm528, %v529, %v527
    %v531 = vrsqrt.pop %v467
    %v532 = vmul.f32 %v467, %v531
    %vm533 = vcmp.eq.f32.partialorder %v467, inf
    %v534 = vsel %vm533, %v467, %v532
    %vm535 = vcmp.eq.f32.partialorder %v467, 0.0
    %v536 = vand.u32 %v467, 2147483648
    %v537 = vsel %vm535, %v536, %v534
    %v538 = vrsqrt.pop %v468
    %v539 = vmul.f32 %v468, %v538
    %vm540 = vcmp.eq.f32.partialorder %v468, inf
    %v541 = vsel %vm540, %v468, %v539
    %vm542 = vcmp.eq.f32.partialorder %v468, 0.0
    %v543 = vand.u32 %v468, 2147483648
    %v544 = vsel %vm542, %v543, %v541
    %v545 = vrsqrt.pop %v469
    %v546 = vmul.f32 %v469, %v545
    %vm547 = vcmp.eq.f32.partialorder %v469, inf
    %v548 = vsel %vm547, %v469, %v546
    %vm549 = vcmp.eq.f32.partialorder %v469, 0.0
    %v550 = vand.u32 %v469, 2147483648
    %v551 = vsel %vm549, %v550, %v548
    %v552 = vrsqrt.pop %v470
    %v553 = vmul.f32 %v470, %v552
    %vm554 = vcmp.eq.f32.partialorder %v470, inf
    %v555 = vsel %vm554, %v470, %v553
    %vm556 = vcmp.eq.f32.partialorder %v470, 0.0
    %v557 = vand.u32 %v470, 2147483648
    %v558 = vsel %vm556, %v557, %v555
    %v559 = vrsqrt.pop %v471
    %v560 = vmul.f32 %v471, %v559
    %vm561 = vcmp.eq.f32.partialorder %v471, inf
    %v562 = vsel %vm561, %v471, %v560
    %vm563 = vcmp.eq.f32.partialorder %v471, 0.0
    %v564 = vand.u32 %v471, 2147483648
    %v565 = vsel %vm563, %v564, %v562
    %v566 = vrsqrt.pop %v472
    %v567 = vmul.f32 %v472, %v566
    %vm568 = vcmp.eq.f32.partialorder %v472, inf
    %v569 = vsel %vm568, %v472, %v567
    %vm570 = vcmp.eq.f32.partialorder %v472, 0.0
    %v571 = vand.u32 %v472, 2147483648
    %v572 = vsel %vm570, %v571, %v569
    %v573 = vrsqrt.pop %v473
    %v574 = vmul.f32 %v473, %v573
    %vm575 = vcmp.eq.f32.partialorder %v473, inf
    %v576 = vsel %vm575, %v473, %v574
    %vm577 = vcmp.eq.f32.partialorder %v473, 0.0
    %v578 = vand.u32 %v473, 2147483648
    %v579 = vsel %vm577, %v578, %v576
    %v580 = vrsqrt.pop %v474
    %v581 = vmul.f32 %v474, %v580
    %vm582 = vcmp.eq.f32.partialorder %v474, inf
    %v583 = vsel %vm582, %v474, %v581
    %vm584 = vcmp.eq.f32.partialorder %v474, 0.0
    %v585 = vand.u32 %v474, 2147483648
    %v586 = vsel %vm584, %v585, %v583
    %v587 = vlaneseq
    %v588 = vand.u32 %v587, 127
    %s589 = smul.u32 0, 128
    %v590 = vstv %s589
    %v591 = vadd.s32 %v588, %v590
    %vm592 = vcmp.lt.s32.totalorder %v591, 8
    %v593 = vld [vmem:[%s4] sm:$0xff]
    %v594 = vld [vmem:[%s4 + $0x8] sm:$0xff]
    %v595 = vld [vmem:[%s4 + $0x10] sm:$0xff]
    %v596 = vld [vmem:[%s4 + $0x18] sm:$0xff]
    %v597 = vld [vmem:[%s4 + $0x20] sm:$0xff]
    %v598 = vld [vmem:[%s4 + $0x28] sm:$0xff]
    %v599 = vld [vmem:[%s4 + $0x30] sm:$0xff]
    %v600 = vld [vmem:[%s4 + $0x38] sm:$0xff]
    %v601 = vld [vmem:[%s4 + $0x40] sm:$0xff]
    %v602 = vld [vmem:[%s4 + $0x48] sm:$0xff]
    %v603 = vld [vmem:[%s4 + $0x50] sm:$0xff]
    %v604 = vld [vmem:[%s4 + $0x58] sm:$0xff]
    %v605 = vld [vmem:[%s4 + $0x60] sm:$0xff]
    %v606 = vld [vmem:[%s4 + $0x68] sm:$0xff]
    %v607 = vld [vmem:[%s4 + $0x70] sm:$0xff]
    %v608 = vld [vmem:[%s4 + $0x78] sm:$0xff]
    %v609 = vld [vmem:[%s5] sm:$0x1]
    %610 = vset.pattern.permute.xlu0 0
    %611 = vperm.xlu0 %610, %v593
    %v612 = vpop.permute.xlu0 %611
    %613 = vset.pattern.permute.xlu0 0
    %614 = vperm.xlu0 %613, %v594
    %v615 = vpop.permute.xlu0 %614
    %616 = vset.pattern.permute.xlu0 0
    %617 = vperm.xlu0 %616, %v595
    %v618 = vpop.permute.xlu0 %617
    %619 = vset.pattern.permute.xlu0 0
    %620 = vperm.xlu0 %619, %v596
    %v621 = vpop.permute.xlu0 %620
    %622 = vset.pattern.permute.xlu0 0
    %623 = vperm.xlu0 %622, %v597
    %v624 = vpop.permute.xlu0 %623
    %625 = vset.pattern.permute.xlu0 0
    %626 = vperm.xlu0 %625, %v598
    %v627 = vpop.permute.xlu0 %626
    %628 = vset.pattern.permute.xlu0 0
    %629 = vperm.xlu0 %628, %v599
    %v630 = vpop.permute.xlu0 %629
    %631 = vset.pattern.permute.xlu0 0
    %632 = vperm.xlu0 %631, %v600
    %v633 = vpop.permute.xlu0 %632
    %634 = vset.pattern.permute.xlu0 0
    %635 = vperm.xlu0 %634, %v601
    %v636 = vpop.permute.xlu0 %635
    %637 = vset.pattern.permute.xlu0 0
    %638 = vperm.xlu0 %637, %v602
    %v639 = vpop.permute.xlu0 %638
    %640 = vset.pattern.permute.xlu0 0
    %641 = vperm.xlu0 %640, %v603
    %v642 = vpop.permute.xlu0 %641
    %643 = vset.pattern.permute.xlu0 0
    %644 = vperm.xlu0 %643, %v604
    %v645 = vpop.permute.xlu0 %644
    %646 = vset.pattern.permute.xlu0 0
    %647 = vperm.xlu0 %646, %v605
    %v648 = vpop.permute.xlu0 %647
    %649 = vset.pattern.permute.xlu0 0
    %650 = vperm.xlu0 %649, %v606
    %v651 = vpop.permute.xlu0 %650
    %652 = vset.pattern.permute.xlu0 0
    %653 = vperm.xlu0 %652, %v607
    %v654 = vpop.permute.xlu0 %653
    %655 = vset.pattern.permute.xlu0 0
    %656 = vperm.xlu0 %655, %v608
    %v657 = vpop.permute.xlu0 %656
    %v658 = vlaneseq
    %v659 = vshrl.u32 %v658, 7
    %v660 = vsub.s32 0, %v659
    %v661 = vrot.slane %v609, %v660
    %vm662 = vcmp.eq.s32.totalorder %v612, %v661
    %vm663 = vcmp.eq.s32.totalorder %v615, %v661
    %vm664 = vcmp.eq.s32.totalorder %v618, %v661
    %vm665 = vcmp.eq.s32.totalorder %v621, %v661
    %vm666 = vcmp.eq.s32.totalorder %v624, %v661
    %vm667 = vcmp.eq.s32.totalorder %v627, %v661
    %vm668 = vcmp.eq.s32.totalorder %v630, %v661
    %vm669 = vcmp.eq.s32.totalorder %v633, %v661
    %vm670 = vcmp.eq.s32.totalorder %v636, %v661
    %vm671 = vcmp.eq.s32.totalorder %v639, %v661
    %vm672 = vcmp.eq.s32.totalorder %v642, %v661
    %vm673 = vcmp.eq.s32.totalorder %v645, %v661
    %vm674 = vcmp.eq.s32.totalorder %v648, %v661
    %vm675 = vcmp.eq.s32.totalorder %v651, %v661
    %vm676 = vcmp.eq.s32.totalorder %v654, %v661
    %vm677 = vcmp.eq.s32.totalorder %v657, %v661
    %v678 = vsel %vm592, 1, 0
    %vm679 = vcmp.eq.s32.totalorder %v678, 1
    %vm680 = vmand %vm662, %vm679
    %vm681 = vmand %vm663, %vm679
    %vm682 = vmand %vm664, %vm679
    %vm683 = vmand %vm665, %vm679
    %vm684 = vmand %vm666, %vm679
    %vm685 = vmand %vm667, %vm679
    %vm686 = vmand %vm668, %vm679
    %vm687 = vmand %vm669, %vm679
    %vm688 = vmand %vm670, %vm679
    %vm689 = vmand %vm671, %vm679
    %vm690 = vmand %vm672, %vm679
    %vm691 = vmand %vm673, %vm679
    %vm692 = vmand %vm674, %vm679
    %vm693 = vmand %vm675, %vm679
    %vm694 = vmand %vm676, %vm679
    %vm695 = vmand %vm677, %vm679
    %vm696 = vmxor %vm662, 1
    %vm697 = vmxor %vm663, 1
    %vm698 = vmxor %vm664, 1
    %vm699 = vmxor %vm665, 1
    %vm700 = vmxor %vm666, 1
    %vm701 = vmxor %vm667, 1
    %vm702 = vmxor %vm668, 1
    %vm703 = vmxor %vm669, 1
    %vm704 = vmxor %vm670, 1
    %vm705 = vmxor %vm671, 1
    %vm706 = vmxor %vm672, 1
    %vm707 = vmxor %vm673, 1
    %vm708 = vmxor %vm674, 1
    %vm709 = vmxor %vm675, 1
    %vm710 = vmxor %vm676, 1
    %vm711 = vmxor %vm677, 1
    %vm712 = vmand %vm696, %vm679
    %vm713 = vmand %vm697, %vm679
    %vm714 = vmand %vm698, %vm679
    %vm715 = vmand %vm699, %vm679
    %vm716 = vmand %vm700, %vm679
    %vm717 = vmand %vm701, %vm679
    %vm718 = vmand %vm702, %vm679
    %vm719 = vmand %vm703, %vm679
    %vm720 = vmand %vm704, %vm679
    %vm721 = vmand %vm705, %vm679
    %vm722 = vmand %vm706, %vm679
    %vm723 = vmand %vm707, %vm679
    %vm724 = vmand %vm708, %vm679
    %vm725 = vmand %vm709, %vm679
    %vm726 = vmand %vm710, %vm679
    %vm727 = vmand %vm711, %vm679
    %v728 = vsel %vm680, %v481, 0.0
    %v729 = vsel %vm681, %v488, 0.0
    %v730 = vsel %vm682, %v495, 0.0
    %v731 = vsel %vm683, %v502, 0.0
    %v732 = vsel %vm684, %v509, 0.0
    %v733 = vsel %vm685, %v516, 0.0
    %v734 = vsel %vm686, %v523, 0.0
    %v735 = vsel %vm687, %v530, 0.0
    %v736 = vsel %vm688, %v537, 0.0
    %v737 = vsel %vm689, %v544, 0.0
    %v738 = vsel %vm690, %v551, 0.0
    %v739 = vsel %vm691, %v558, 0.0
    %v740 = vsel %vm692, %v565, 0.0
    %v741 = vsel %vm693, %v572, 0.0
    %v742 = vsel %vm694, %v579, 0.0
    %v743 = vsel %vm695, %v586, 0.0
    %v744 = vsub.f32 0.0, %v481
    %v745 = vsub.f32 0.0, %v488
    %v746 = vsub.f32 0.0, %v495
    %v747 = vsub.f32 0.0, %v502
    %v748 = vsub.f32 0.0, %v509
    %v749 = vsub.f32 0.0, %v516
    %v750 = vsub.f32 0.0, %v523
    %v751 = vsub.f32 0.0, %v530
    %v752 = vsub.f32 0.0, %v537
    %v753 = vsub.f32 0.0, %v544
    %v754 = vsub.f32 0.0, %v551
    %v755 = vsub.f32 0.0, %v558
    %v756 = vsub.f32 0.0, %v565
    %v757 = vsub.f32 0.0, %v572
    %v758 = vsub.f32 0.0, %v579
    %v759 = vsub.f32 0.0, %v586
    %v760 = vsel %vm712, %v744, 0.0
    %v761 = vsel %vm713, %v745, 0.0
    %v762 = vsel %vm714, %v746, 0.0
    %v763 = vsel %vm715, %v747, 0.0
    %v764 = vsel %vm716, %v748, 0.0
    %v765 = vsel %vm717, %v749, 0.0
    %v766 = vsel %vm718, %v750, 0.0
    %v767 = vsel %vm719, %v751, 0.0
    %v768 = vsel %vm720, %v752, 0.0
    %v769 = vsel %vm721, %v753, 0.0
    %v770 = vsel %vm722, %v754, 0.0
    %v771 = vsel %vm723, %v755, 0.0
    %v772 = vsel %vm724, %v756, 0.0
    %v773 = vsel %vm725, %v757, 0.0
    %v774 = vsel %vm726, %v758, 0.0
    %v775 = vsel %vm727, %v759, 0.0
    %v776 = vld [vmem:[#allocation2] sm:$0xff]
    %v777 = vld [vmem:[#allocation2 + $0x8] sm:$0xff]
    %v778 = vld [vmem:[#allocation2 + $0x10] sm:$0xff]
    %v779 = vld [vmem:[#allocation2 + $0x18] sm:$0xff]
    %v780 = vld [vmem:[#allocation2 + $0x20] sm:$0xff]
    %v781 = vld [vmem:[#allocation2 + $0x28] sm:$0xff]
    %v782 = vld [vmem:[#allocation2 + $0x30] sm:$0xff]
    %v783 = vld [vmem:[#allocation2 + $0x38] sm:$0xff]
    %v784 = vld [vmem:[#allocation2 + $0x40] sm:$0xff]
    %v785 = vld [vmem:[#allocation2 + $0x48] sm:$0xff]
    %v786 = vld [vmem:[#allocation2 + $0x50] sm:$0xff]
    %v787 = vld [vmem:[#allocation2 + $0x58] sm:$0xff]
    %v788 = vld [vmem:[#allocation2 + $0x60] sm:$0xff]
    %v789 = vld [vmem:[#allocation2 + $0x68] sm:$0xff]
    %v790 = vld [vmem:[#allocation2 + $0x70] sm:$0xff]
    %v791 = vld [vmem:[#allocation2 + $0x78] sm:$0xff]
    %792 = vmax.xlane.f32.xlu0 %v728
    %v793 = vpop.xlane.xlu0 %792
    %794 = vmax.xlane.f32.xlu0 %v729
    %v795 = vpop.xlane.xlu0 %794
    %796 = vmax.xlane.f32.xlu0 %v730
    %v797 = vpop.xlane.xlu0 %796
    %798 = vmax.xlane.f32.xlu0 %v731
    %v799 = vpop.xlane.xlu0 %798
    %800 = vmax.xlane.f32.xlu0 %v732
    %v801 = vpop.xlane.xlu0 %800
    %802 = vmax.xlane.f32.xlu0 %v733
    %v803 = vpop.xlane.xlu0 %802
    %804 = vmax.xlane.f32.xlu0 %v734
    %v805 = vpop.xlane.xlu0 %804
    %806 = vmax.xlane.f32.xlu0 %v735
    %v807 = vpop.xlane.xlu0 %806
    %808 = vmax.xlane.f32.xlu0 %v736
    %v809 = vpop.xlane.xlu0 %808
    %810 = vmax.xlane.f32.xlu0 %v737
    %v811 = vpop.xlane.xlu0 %810
    %812 = vmax.xlane.f32.xlu0 %v738
    %v813 = vpop.xlane.xlu0 %812
    %814 = vmax.xlane.f32.xlu0 %v739
    %v815 = vpop.xlane.xlu0 %814
    %816 = vmax.xlane.f32.xlu0 %v740
    %v817 = vpop.xlane.xlu0 %816
    %818 = vmax.xlane.f32.xlu0 %v741
    %v819 = vpop.xlane.xlu0 %818
    %820 = vmax.xlane.f32.xlu0 %v742
    %v821 = vpop.xlane.xlu0 %820
    %822 = vmax.xlane.f32.xlu0 %v743
    %v823 = vpop.xlane.xlu0 %822
    %v824 = vmax.f32 %v776, %v793
    %v825 = vmax.f32 %v777, %v795
    %v826 = vmax.f32 %v778, %v797
    %v827 = vmax.f32 %v779, %v799
    %v828 = vmax.f32 %v780, %v801
    %v829 = vmax.f32 %v781, %v803
    %v830 = vmax.f32 %v782, %v805
    %v831 = vmax.f32 %v783, %v807
    %v832 = vmax.f32 %v784, %v809
    %v833 = vmax.f32 %v785, %v811
    %v834 = vmax.f32 %v786, %v813
    %v835 = vmax.f32 %v787, %v815
    %v836 = vmax.f32 %v788, %v817
    %v837 = vmax.f32 %v789, %v819
    %v838 = vmax.f32 %v790, %v821
    %v839 = vmax.f32 %v791, %v823
    %v840 = vsub.f32 %v776, %v824
    %v841 = vsub.f32 %v777, %v825
    %v842 = vsub.f32 %v778, %v826
    %v843 = vsub.f32 %v779, %v827
    %v844 = vsub.f32 %v780, %v828
    %v845 = vsub.f32 %v781, %v829
    %v846 = vsub.f32 %v782, %v830
    %v847 = vsub.f32 %v783, %v831
    %v848 = vsub.f32 %v784, %v832
    %v849 = vsub.f32 %v785, %v833
    %v850 = vsub.f32 %v786, %v834
    %v851 = vsub.f32 %v787, %v835
    %v852 = vsub.f32 %v788, %v836
    %v853 = vsub.f32 %v789, %v837
    %v854 = vsub.f32 %v790, %v838
    %v855 = vsub.f32 %v791, %v839
    %v856 = vmul.f32 %v840, 1.442695
    %v857 = vpow.pop %v856
    %v858 = vmul.f32 %v841, 1.442695
    %v859 = vpow.pop %v858
    %v860 = vmul.f32 %v842, 1.442695
    %v861 = vpow.pop %v860
    %v862 = vmul.f32 %v843, 1.442695
    %v863 = vpow.pop %v862
    %v864 = vmul.f32 %v844, 1.442695
    %v865 = vpow.pop %v864
    %v866 = vmul.f32 %v845, 1.442695
    %v867 = vpow.pop %v866
    %v868 = vmul.f32 %v846, 1.442695
    %v869 = vpow.pop %v868
    %v870 = vmul.f32 %v847, 1.442695
    %v871 = vpow.pop %v870
    %v872 = vmul.f32 %v848, 1.442695
    %v873 = vpow.pop %v872
    %v874 = vmul.f32 %v849, 1.442695
    %v875 = vpow.pop %v874
    %v876 = vmul.f32 %v850, 1.442695
    %v877 = vpow.pop %v876
    %v878 = vmul.f32 %v851, 1.442695
    %v879 = vpow.pop %v878
    %v880 = vmul.f32 %v852, 1.442695
    %v881 = vpow.pop %v880
    %v882 = vmul.f32 %v853, 1.442695
    %v883 = vpow.pop %v882
    %v884 = vmul.f32 %v854, 1.442695
    %v885 = vpow.pop %v884
    %v886 = vmul.f32 %v855, 1.442695
    %v887 = vpow.pop %v886
    %889 = vset.pattern.permute.xlu0 0
    %890 = vperm.xlu0 %889, %v824
    %v891 = vpop.permute.xlu0 %890
    %894 = vset.pattern.permute.xlu0 0
    %895 = vperm.xlu0 %894, %v825
    %v896 = vpop.permute.xlu0 %895
    %899 = vset.pattern.permute.xlu0 0
    %900 = vperm.xlu0 %899, %v826
    %v901 = vpop.permute.xlu0 %900
    %904 = vset.pattern.permute.xlu0 0
    %905 = vperm.xlu0 %904, %v827
    %v906 = vpop.permute.xlu0 %905
    %909 = vset.pattern.permute.xlu0 0
    %910 = vperm.xlu0 %909, %v828
    %v911 = vpop.permute.xlu0 %910
    %914 = vset.pattern.permute.xlu0 0
    %915 = vperm.xlu0 %914, %v829
    %v916 = vpop.permute.xlu0 %915
    %919 = vset.pattern.permute.xlu0 0
    %920 = vperm.xlu0 %919, %v830
    %v921 = vpop.permute.xlu0 %920
    %924 = vset.pattern.permute.xlu0 0
    %925 = vperm.xlu0 %924, %v831
    %v926 = vpop.permute.xlu0 %925
    %929 = vset.pattern.permute.xlu0 0
    %930 = vperm.xlu0 %929, %v832
    %v931 = vpop.permute.xlu0 %930
    %934 = vset.pattern.permute.xlu0 0
    %935 = vperm.xlu0 %934, %v833
    %v936 = vpop.permute.xlu0 %935
    %939 = vset.pattern.permute.xlu0 0
    %940 = vperm.xlu0 %939, %v834
    %v941 = vpop.permute.xlu0 %940
    %944 = vset.pattern.permute.xlu0 0
    %945 = vperm.xlu0 %944, %v835
    %v946 = vpop.permute.xlu0 %945
    %949 = vset.pattern.permute.xlu0 0
    %950 = vperm.xlu0 %949, %v836
    %v951 = vpop.permute.xlu0 %950
    %954 = vset.pattern.permute.xlu0 0
    %955 = vperm.xlu0 %954, %v837
    %v956 = vpop.permute.xlu0 %955
    %959 = vset.pattern.permute.xlu0 0
    %960 = vperm.xlu0 %959, %v838
    %v961 = vpop.permute.xlu0 %960
    %964 = vset.pattern.permute.xlu0 0
    %965 = vperm.xlu0 %964, %v839
    %v966 = vpop.permute.xlu0 %965
    %v968 = vsub.f32 %v728, %v891
    %v969 = vsub.f32 %v729, %v896
    %v970 = vsub.f32 %v730, %v901
    %v971 = vsub.f32 %v731, %v906
    %v972 = vsub.f32 %v732, %v911
    %v973 = vsub.f32 %v733, %v916
    %v974 = vsub.f32 %v734, %v921
    %v975 = vsub.f32 %v735, %v926
    %v976 = vsub.f32 %v736, %v931
    %v977 = vsub.f32 %v737, %v936
    %v978 = vsub.f32 %v738, %v941
    %v979 = vsub.f32 %v739, %v946
    %v980 = vsub.f32 %v740, %v951
    %v981 = vsub.f32 %v741, %v956
    %v982 = vsub.f32 %v742, %v961
    %v983 = vsub.f32 %v743, %v966
    %v984 = vmul.f32 %v968, 1.442695
    %v985 = vpow.pop %v984
    %v986 = vmul.f32 %v969, 1.442695
    %v987 = vpow.pop %v986
    %v988 = vmul.f32 %v970, 1.442695
    %v989 = vpow.pop %v988
    %v990 = vmul.f32 %v971, 1.442695
    %v991 = vpow.pop %v990
    %v992 = vmul.f32 %v972, 1.442695
    %v993 = vpow.pop %v992
    %v994 = vmul.f32 %v973, 1.442695
    %v995 = vpow.pop %v994
    %v996 = vmul.f32 %v974, 1.442695
    %v997 = vpow.pop %v996
    %v998 = vmul.f32 %v975, 1.442695
    %v999 = vpow.pop %v998
    %v1000 = vmul.f32 %v976, 1.442695
    %v1001 = vpow.pop %v1000
    %v1002 = vmul.f32 %v977, 1.442695
    %v1003 = vpow.pop %v1002
    %v1004 = vmul.f32 %v978, 1.442695
    %v1005 = vpow.pop %v1004
    %v1006 = vmul.f32 %v979, 1.442695
    %v1007 = vpow.pop %v1006
    %v1008 = vmul.f32 %v980, 1.442695
    %v1009 = vpow.pop %v1008
    %v1010 = vmul.f32 %v981, 1.442695
    %v1011 = vpow.pop %v1010
    %v1012 = vmul.f32 %v982, 1.442695
    %v1013 = vpow.pop %v1012
    %v1014 = vmul.f32 %v983, 1.442695
    %v1015 = vpow.pop %v1014
    %v1016 = vsel %vm680, %v985, 0.0
    %v1017 = vsel %vm681, %v987, 0.0
    %v1018 = vsel %vm682, %v989, 0.0
    %v1019 = vsel %vm683, %v991, 0.0
    %v1020 = vsel %vm684, %v993, 0.0
    %v1021 = vsel %vm685, %v995, 0.0
    %v1022 = vsel %vm686, %v997, 0.0
    %v1023 = vsel %vm687, %v999, 0.0
    %v1024 = vsel %vm688, %v1001, 0.0
    %v1025 = vsel %vm689, %v1003, 0.0
    %v1026 = vsel %vm690, %v1005, 0.0
    %v1027 = vsel %vm691, %v1007, 0.0
    %v1028 = vsel %vm692, %v1009, 0.0
    %v1029 = vsel %vm693, %v1011, 0.0
    %v1030 = vsel %vm694, %v1013, 0.0
    %v1031 = vsel %vm695, %v1015, 0.0
    %v1032 = vld [vmem:[#allocation3] sm:$0xff]
    %v1033 = vld [vmem:[#allocation3 + $0x8] sm:$0xff]
    %v1034 = vld [vmem:[#allocation3 + $0x10] sm:$0xff]
    %v1035 = vld [vmem:[#allocation3 + $0x18] sm:$0xff]
    %v1036 = vld [vmem:[#allocation3 + $0x20] sm:$0xff]
    %v1037 = vld [vmem:[#allocation3 + $0x28] sm:$0xff]
    %v1038 = vld [vmem:[#allocation3 + $0x30] sm:$0xff]
    %v1039 = vld [vmem:[#allocation3 + $0x38] sm:$0xff]
    %v1040 = vld [vmem:[#allocation3 + $0x40] sm:$0xff]
    %v1041 = vld [vmem:[#allocation3 + $0x48] sm:$0xff]
    %v1042 = vld [vmem:[#allocation3 + $0x50] sm:$0xff]
    %v1043 = vld [vmem:[#allocation3 + $0x58] sm:$0xff]
    %v1044 = vld [vmem:[#allocation3 + $0x60] sm:$0xff]
    %v1045 = vld [vmem:[#allocation3 + $0x68] sm:$0xff]
    %v1046 = vld [vmem:[#allocation3 + $0x70] sm:$0xff]
    %v1047 = vld [vmem:[#allocation3 + $0x78] sm:$0xff]
    %v1048 = vmul.f32 %v1032, %v857
    %v1049 = vmul.f32 %v1033, %v859
    %v1050 = vmul.f32 %v1034, %v861
    %v1051 = vmul.f32 %v1035, %v863
    %v1052 = vmul.f32 %v1036, %v865
    %v1053 = vmul.f32 %v1037, %v867
    %v1054 = vmul.f32 %v1038, %v869
    %v1055 = vmul.f32 %v1039, %v871
    %v1056 = vmul.f32 %v1040, %v873
    %v1057 = vmul.f32 %v1041, %v875
    %v1058 = vmul.f32 %v1042, %v877
    %v1059 = vmul.f32 %v1043, %v879
    %v1060 = vmul.f32 %v1044, %v881
    %v1061 = vmul.f32 %v1045, %v883
    %v1062 = vmul.f32 %v1046, %v885
    %v1063 = vmul.f32 %v1047, %v887
    %1064 = vadd.xlane.f32.xlu0 %v1016
    %v1065 = vpop.xlane.xlu0 %1064
    %1066 = vadd.xlane.f32.xlu0 %v1017
    %v1067 = vpop.xlane.xlu0 %1066
    %1068 = vadd.xlane.f32.xlu0 %v1018
    %v1069 = vpop.xlane.xlu0 %1068
    %1070 = vadd.xlane.f32.xlu0 %v1019
    %v1071 = vpop.xlane.xlu0 %1070
    %1072 = vadd.xlane.f32.xlu0 %v1020
    %v1073 = vpop.xlane.xlu0 %1072
    %1074 = vadd.xlane.f32.xlu0 %v1021
    %v1075 = vpop.xlane.xlu0 %1074
    %1076 = vadd.xlane.f32.xlu0 %v1022
    %v1077 = vpop.xlane.xlu0 %1076
    %1078 = vadd.xlane.f32.xlu0 %v1023
    %v1079 = vpop.xlane.xlu0 %1078
    %1080 = vadd.xlane.f32.xlu0 %v1024
    %v1081 = vpop.xlane.xlu0 %1080
    %1082 = vadd.xlane.f32.xlu0 %v1025
    %v1083 = vpop.xlane.xlu0 %1082
    %1084 = vadd.xlane.f32.xlu0 %v1026
    %v1085 = vpop.xlane.xlu0 %1084
    %1086 = vadd.xlane.f32.xlu0 %v1027
    %v1087 = vpop.xlane.xlu0 %1086
    %1088 = vadd.xlane.f32.xlu0 %v1028
    %v1089 = vpop.xlane.xlu0 %1088
    %1090 = vadd.xlane.f32.xlu0 %v1029
    %v1091 = vpop.xlane.xlu0 %1090
    %1092 = vadd.xlane.f32.xlu0 %v1030
    %v1093 = vpop.xlane.xlu0 %1092
    %1094 = vadd.xlane.f32.xlu0 %v1031
    %v1095 = vpop.xlane.xlu0 %1094
    %v1096 = vadd.f32 %v1048, %v1065
    %v1097 = vadd.f32 %v1049, %v1067
    %v1098 = vadd.f32 %v1050, %v1069
    %v1099 = vadd.f32 %v1051, %v1071
    %v1100 = vadd.f32 %v1052, %v1073
    %v1101 = vadd.f32 %v1053, %v1075
    %v1102 = vadd.f32 %v1054, %v1077
    %v1103 = vadd.f32 %v1055, %v1079
    %v1104 = vadd.f32 %v1056, %v1081
    %v1105 = vadd.f32 %v1057, %v1083
    %v1106 = vadd.f32 %v1058, %v1085
    %v1107 = vadd.f32 %v1059, %v1087
    %v1108 = vadd.f32 %v1060, %v1089
    %v1109 = vadd.f32 %v1061, %v1091
    %v1110 = vadd.f32 %v1062, %v1093
    %v1111 = vadd.f32 %v1063, %v1095
    %vm1112 = vcmask 7168
    %1113 = vst.msk [vmem:[#allocation3] sm:$0xff] %vm1112, %v1096
    %1114 = vst.msk [vmem:[#allocation3 + $0x8] sm:$0xff] %vm1112, %v1097
    %1115 = vst.msk [vmem:[#allocation3 + $0x10] sm:$0xff] %vm1112, %v1098
    %1116 = vst.msk [vmem:[#allocation3 + $0x18] sm:$0xff] %vm1112, %v1099
    %1117 = vst.msk [vmem:[#allocation3 + $0x20] sm:$0xff] %vm1112, %v1100
    %1118 = vst.msk [vmem:[#allocation3 + $0x28] sm:$0xff] %vm1112, %v1101
    %1119 = vst.msk [vmem:[#allocation3 + $0x30] sm:$0xff] %vm1112, %v1102
    %1120 = vst.msk [vmem:[#allocation3 + $0x38] sm:$0xff] %vm1112, %v1103
    %1121 = vst.msk [vmem:[#allocation3 + $0x40] sm:$0xff] %vm1112, %v1104
    %1122 = vst.msk [vmem:[#allocation3 + $0x48] sm:$0xff] %vm1112, %v1105
    %1123 = vst.msk [vmem:[#allocation3 + $0x50] sm:$0xff] %vm1112, %v1106
    %1124 = vst.msk [vmem:[#allocation3 + $0x58] sm:$0xff] %vm1112, %v1107
    %1125 = vst.msk [vmem:[#allocation3 + $0x60] sm:$0xff] %vm1112, %v1108
    %1126 = vst.msk [vmem:[#allocation3 + $0x68] sm:$0xff] %vm1112, %v1109
    %1127 = vst.msk [vmem:[#allocation3 + $0x70] sm:$0xff] %vm1112, %v1110
    %1128 = vst.msk [vmem:[#allocation3 + $0x78] sm:$0xff] %vm1112, %v1111
    %v1129 = vld [vmem:[#allocation4] sm:$0xff]
    %v1130 = vld [vmem:[#allocation4 + $0x8] sm:$0xff]
    %v1131 = vld [vmem:[#allocation4 + $0x10] sm:$0xff]
    %v1132 = vld [vmem:[#allocation4 + $0x18] sm:$0xff]
    %v1133 = vld [vmem:[#allocation4 + $0x20] sm:$0xff]
    %v1134 = vld [vmem:[#allocation4 + $0x28] sm:$0xff]
    %v1135 = vld [vmem:[#allocation4 + $0x30] sm:$0xff]
    %v1136 = vld [vmem:[#allocation4 + $0x38] sm:$0xff]
    %v1137 = vld [vmem:[#allocation4 + $0x40] sm:$0xff]
    %v1138 = vld [vmem:[#allocation4 + $0x48] sm:$0xff]
    %v1139 = vld [vmem:[#allocation4 + $0x50] sm:$0xff]
    %v1140 = vld [vmem:[#allocation4 + $0x58] sm:$0xff]
    %v1141 = vld [vmem:[#allocation4 + $0x60] sm:$0xff]
    %v1142 = vld [vmem:[#allocation4 + $0x68] sm:$0xff]
    %v1143 = vld [vmem:[#allocation4 + $0x70] sm:$0xff]
    %v1144 = vld [vmem:[#allocation4 + $0x78] sm:$0xff]
    %v1145 = vmul.f32 %v1129, %v857
    %v1146 = vmul.f32 %v1130, %v859
    %v1147 = vmul.f32 %v1131, %v861
    %v1148 = vmul.f32 %v1132, %v863
    %v1149 = vmul.f32 %v1133, %v865
    %v1150 = vmul.f32 %v1134, %v867
    %v1151 = vmul.f32 %v1135, %v869
    %v1152 = vmul.f32 %v1136, %v871
    %v1153 = vmul.f32 %v1137, %v873
    %v1154 = vmul.f32 %v1138, %v875
    %v1155 = vmul.f32 %v1139, %v877
    %v1156 = vmul.f32 %v1140, %v879
    %v1157 = vmul.f32 %v1141, %v881
    %v1158 = vmul.f32 %v1142, %v883
    %v1159 = vmul.f32 %v1143, %v885
    %v1160 = vmul.f32 %v1144, %v887
    %v1161 = vmul.f32 %v481, %v1016
    %v1162 = vmul.f32 %v488, %v1017
    %v1163 = vmul.f32 %v495, %v1018
    %v1164 = vmul.f32 %v502, %v1019
    %v1165 = vmul.f32 %v509, %v1020
    %v1166 = vmul.f32 %v516, %v1021
    %v1167 = vmul.f32 %v523, %v1022
    %v1168 = vmul.f32 %v530, %v1023
    %v1169 = vmul.f32 %v537, %v1024
    %v1170 = vmul.f32 %v544, %v1025
    %v1171 = vmul.f32 %v551, %v1026
    %v1172 = vmul.f32 %v558, %v1027
    %v1173 = vmul.f32 %v565, %v1028
    %v1174 = vmul.f32 %v572, %v1029
    %v1175 = vmul.f32 %v579, %v1030
    %v1176 = vmul.f32 %v586, %v1031
    %1177 = vadd.xlane.f32.xlu0 %v1161
    %v1178 = vpop.xlane.xlu0 %1177
    %1179 = vadd.xlane.f32.xlu0 %v1162
    %v1180 = vpop.xlane.xlu0 %1179
    %1181 = vadd.xlane.f32.xlu0 %v1163
    %v1182 = vpop.xlane.xlu0 %1181
    %1183 = vadd.xlane.f32.xlu0 %v1164
    %v1184 = vpop.xlane.xlu0 %1183
    %1185 = vadd.xlane.f32.xlu0 %v1165
    %v1186 = vpop.xlane.xlu0 %1185
    %1187 = vadd.xlane.f32.xlu0 %v1166
    %v1188 = vpop.xlane.xlu0 %1187
    %1189 = vadd.xlane.f32.xlu0 %v1167
    %v1190 = vpop.xlane.xlu0 %1189
    %1191 = vadd.xlane.f32.xlu0 %v1168
    %v1192 = vpop.xlane.xlu0 %1191
    %1193 = vadd.xlane.f32.xlu0 %v1169
    %v1194 = vpop.xlane.xlu0 %1193
    %1195 = vadd.xlane.f32.xlu0 %v1170
    %v1196 = vpop.xlane.xlu0 %1195
    %1197 = vadd.xlane.f32.xlu0 %v1171
    %v1198 = vpop.xlane.xlu0 %1197
    %1199 = vadd.xlane.f32.xlu0 %v1172
    %v1200 = vpop.xlane.xlu0 %1199
    %1201 = vadd.xlane.f32.xlu0 %v1173
    %v1202 = vpop.xlane.xlu0 %1201
    %1203 = vadd.xlane.f32.xlu0 %v1174
    %v1204 = vpop.xlane.xlu0 %1203
    %1205 = vadd.xlane.f32.xlu0 %v1175
    %v1206 = vpop.xlane.xlu0 %1205
    %1207 = vadd.xlane.f32.xlu0 %v1176
    %v1208 = vpop.xlane.xlu0 %1207
    %v1209 = vadd.f32 %v1145, %v1178
    %v1210 = vadd.f32 %v1146, %v1180
    %v1211 = vadd.f32 %v1147, %v1182
    %v1212 = vadd.f32 %v1148, %v1184
    %v1213 = vadd.f32 %v1149, %v1186
    %v1214 = vadd.f32 %v1150, %v1188
    %v1215 = vadd.f32 %v1151, %v1190
    %v1216 = vadd.f32 %v1152, %v1192
    %v1217 = vadd.f32 %v1153, %v1194
    %v1218 = vadd.f32 %v1154, %v1196
    %v1219 = vadd.f32 %v1155, %v1198
    %v1220 = vadd.f32 %v1156, %v1200
    %v1221 = vadd.f32 %v1157, %v1202
    %v1222 = vadd.f32 %v1158, %v1204
    %v1223 = vadd.f32 %v1159, %v1206
    %v1224 = vadd.f32 %v1160, %v1208
    %1225 = vst.msk [vmem:[#allocation4] sm:$0xff] %vm1112, %v1209
    %1226 = vst.msk [vmem:[#allocation4 + $0x8] sm:$0xff] %vm1112, %v1210
    %1227 = vst.msk [vmem:[#allocation4 + $0x10] sm:$0xff] %vm1112, %v1211
    %1228 = vst.msk [vmem:[#allocation4 + $0x18] sm:$0xff] %vm1112, %v1212
    %1229 = vst.msk [vmem:[#allocation4 + $0x20] sm:$0xff] %vm1112, %v1213
    %1230 = vst.msk [vmem:[#allocation4 + $0x28] sm:$0xff] %vm1112, %v1214
    %1231 = vst.msk [vmem:[#allocation4 + $0x30] sm:$0xff] %vm1112, %v1215
    %1232 = vst.msk [vmem:[#allocation4 + $0x38] sm:$0xff] %vm1112, %v1216
    %1233 = vst.msk [vmem:[#allocation4 + $0x40] sm:$0xff] %vm1112, %v1217
    %1234 = vst.msk [vmem:[#allocation4 + $0x48] sm:$0xff] %vm1112, %v1218
    %1235 = vst.msk [vmem:[#allocation4 + $0x50] sm:$0xff] %vm1112, %v1219
    %1236 = vst.msk [vmem:[#allocation4 + $0x58] sm:$0xff] %vm1112, %v1220
    %1237 = vst.msk [vmem:[#allocation4 + $0x60] sm:$0xff] %vm1112, %v1221
    %1238 = vst.msk [vmem:[#allocation4 + $0x68] sm:$0xff] %vm1112, %v1222
    %1239 = vst.msk [vmem:[#allocation4 + $0x70] sm:$0xff] %vm1112, %v1223
    %1240 = vst.msk [vmem:[#allocation4 + $0x78] sm:$0xff] %vm1112, %v1224
    %1241 = vst.msk [vmem:[#allocation2] sm:$0xff] %vm1112, %v824
    %1242 = vst.msk [vmem:[#allocation2 + $0x8] sm:$0xff] %vm1112, %v825
    %1243 = vst.msk [vmem:[#allocation2 + $0x10] sm:$0xff] %vm1112, %v826
    %1244 = vst.msk [vmem:[#allocation2 + $0x18] sm:$0xff] %vm1112, %v827
    %1245 = vst.msk [vmem:[#allocation2 + $0x20] sm:$0xff] %vm1112, %v828
    %1246 = vst.msk [vmem:[#allocation2 + $0x28] sm:$0xff] %vm1112, %v829
    %1247 = vst.msk [vmem:[#allocation2 + $0x30] sm:$0xff] %vm1112, %v830
    %1248 = vst.msk [vmem:[#allocation2 + $0x38] sm:$0xff] %vm1112, %v831
    %1249 = vst.msk [vmem:[#allocation2 + $0x40] sm:$0xff] %vm1112, %v832
    %1250 = vst.msk [vmem:[#allocation2 + $0x48] sm:$0xff] %vm1112, %v833
    %1251 = vst.msk [vmem:[#allocation2 + $0x50] sm:$0xff] %vm1112, %v834
    %1252 = vst.msk [vmem:[#allocation2 + $0x58] sm:$0xff] %vm1112, %v835
    %1253 = vst.msk [vmem:[#allocation2 + $0x60] sm:$0xff] %vm1112, %v836
    %1254 = vst.msk [vmem:[#allocation2 + $0x68] sm:$0xff] %vm1112, %v837
    %1255 = vst.msk [vmem:[#allocation2 + $0x70] sm:$0xff] %vm1112, %v838
    %1256 = vst.msk [vmem:[#allocation2 + $0x78] sm:$0xff] %vm1112, %v839
    %v1257 = vld [vmem:[#allocation5] sm:$0xff]
    %v1258 = vld [vmem:[#allocation5 + $0x8] sm:$0xff]
    %v1259 = vld [vmem:[#allocation5 + $0x10] sm:$0xff]
    %v1260 = vld [vmem:[#allocation5 + $0x18] sm:$0xff]
    %v1261 = vld [vmem:[#allocation5 + $0x20] sm:$0xff]
    %v1262 = vld [vmem:[#allocation5 + $0x28] sm:$0xff]
    %v1263 = vld [vmem:[#allocation5 + $0x30] sm:$0xff]
    %v1264 = vld [vmem:[#allocation5 + $0x38] sm:$0xff]
    %v1265 = vld [vmem:[#allocation5 + $0x40] sm:$0xff]
    %v1266 = vld [vmem:[#allocation5 + $0x48] sm:$0xff]
    %v1267 = vld [vmem:[#allocation5 + $0x50] sm:$0xff]
    %v1268 = vld [vmem:[#allocation5 + $0x58] sm:$0xff]
    %v1269 = vld [vmem:[#allocation5 + $0x60] sm:$0xff]
    %v1270 = vld [vmem:[#allocation5 + $0x68] sm:$0xff]
    %v1271 = vld [vmem:[#allocation5 + $0x70] sm:$0xff]
    %v1272 = vld [vmem:[#allocation5 + $0x78] sm:$0xff]
    %1273 = vmax.xlane.f32.xlu0 %v760
    %v1274 = vpop.xlane.xlu0 %1273
    %1275 = vmax.xlane.f32.xlu0 %v761
    %v1276 = vpop.xlane.xlu0 %1275
    %1277 = vmax.xlane.f32.xlu0 %v762
    %v1278 = vpop.xlane.xlu0 %1277
    %1279 = vmax.xlane.f32.xlu0 %v763
    %v1280 = vpop.xlane.xlu0 %1279
    %1281 = vmax.xlane.f32.xlu0 %v764
    %v1282 = vpop.xlane.xlu0 %1281
    %1283 = vmax.xlane.f32.xlu0 %v765
    %v1284 = vpop.xlane.xlu0 %1283
    %1285 = vmax.xlane.f32.xlu0 %v766
    %v1286 = vpop.xlane.xlu0 %1285
    %1287 = vmax.xlane.f32.xlu0 %v767
    %v1288 = vpop.xlane.xlu0 %1287
    %1289 = vmax.xlane.f32.xlu0 %v768
    %v1290 = vpop.xlane.xlu0 %1289
    %1291 = vmax.xlane.f32.xlu0 %v769
    %v1292 = vpop.xlane.xlu0 %1291
    %1293 = vmax.xlane.f32.xlu0 %v770
    %v1294 = vpop.xlane.xlu0 %1293
    %1295 = vmax.xlane.f32.xlu0 %v771
    %v1296 = vpop.xlane.xlu0 %1295
    %1297 = vmax.xlane.f32.xlu0 %v772
    %v1298 = vpop.xlane.xlu0 %1297
    %1299 = vmax.xlane.f32.xlu0 %v773
    %v1300 = vpop.xlane.xlu0 %1299
    %1301 = vmax.xlane.f32.xlu0 %v774
    %v1302 = vpop.xlane.xlu0 %1301
    %1303 = vmax.xlane.f32.xlu0 %v775
    %v1304 = vpop.xlane.xlu0 %1303
    %v1305 = vmax.f32 %v1257, %v1274
    %v1306 = vmax.f32 %v1258, %v1276
    %v1307 = vmax.f32 %v1259, %v1278
    %v1308 = vmax.f32 %v1260, %v1280
    %v1309 = vmax.f32 %v1261, %v1282
    %v1310 = vmax.f32 %v1262, %v1284
    %v1311 = vmax.f32 %v1263, %v1286
    %v1312 = vmax.f32 %v1264, %v1288
    %v1313 = vmax.f32 %v1265, %v1290
    %v1314 = vmax.f32 %v1266, %v1292
    %v1315 = vmax.f32 %v1267, %v1294
    %v1316 = vmax.f32 %v1268, %v1296
    %v1317 = vmax.f32 %v1269, %v1298
    %v1318 = vmax.f32 %v1270, %v1300
    %v1319 = vmax.f32 %v1271, %v1302
    %v1320 = vmax.f32 %v1272, %v1304
    %v1321 = vsub.f32 %v1257, %v1305
    %v1322 = vsub.f32 %v1258, %v1306
    %v1323 = vsub.f32 %v1259, %v1307
    %v1324 = vsub.f32 %v1260, %v1308
    %v1325 = vsub.f32 %v1261, %v1309
    %v1326 = vsub.f32 %v1262, %v1310
    %v1327 = vsub.f32 %v1263, %v1311
    %v1328 = vsub.f32 %v1264, %v1312
    %v1329 = vsub.f32 %v1265, %v1313
    %v1330 = vsub.f32 %v1266, %v1314
    %v1331 = vsub.f32 %v1267, %v1315
    %v1332 = vsub.f32 %v1268, %v1316
    %v1333 = vsub.f32 %v1269, %v1317
    %v1334 = vsub.f32 %v1270, %v1318
    %v1335 = vsub.f32 %v1271, %v1319
    %v1336 = vsub.f32 %v1272, %v1320
    %v1337 = vmul.f32 %v1321, 1.442695
    %v1338 = vpow.pop %v1337
    %v1339 = vmul.f32 %v1322, 1.442695
    %v1340 = vpow.pop %v1339
    %v1341 = vmul.f32 %v1323, 1.442695
    %v1342 = vpow.pop %v1341
    %v1343 = vmul.f32 %v1324, 1.442695
    %v1344 = vpow.pop %v1343
    %v1345 = vmul.f32 %v1325, 1.442695
    %v1346 = vpow.pop %v1345
    %v1347 = vmul.f32 %v1326, 1.442695
    %v1348 = vpow.pop %v1347
    %v1349 = vmul.f32 %v1327, 1.442695
    %v1350 = vpow.pop %v1349
    %v1351 = vmul.f32 %v1328, 1.442695
    %v1352 = vpow.pop %v1351
    %v1353 = vmul.f32 %v1329, 1.442695
    %v1354 = vpow.pop %v1353
    %v1355 = vmul.f32 %v1330, 1.442695
    %v1356 = vpow.pop %v1355
    %v1357 = vmul.f32 %v1331, 1.442695
    %v1358 = vpow.pop %v1357
    %v1359 = vmul.f32 %v1332, 1.442695
    %v1360 = vpow.pop %v1359
    %v1361 = vmul.f32 %v1333, 1.442695
    %v1362 = vpow.pop %v1361
    %v1363 = vmul.f32 %v1334, 1.442695
    %v1364 = vpow.pop %v1363
    %v1365 = vmul.f32 %v1335, 1.442695
    %v1366 = vpow.pop %v1365
    %v1367 = vmul.f32 %v1336, 1.442695
    %v1368 = vpow.pop %v1367
    %1370 = vset.pattern.permute.xlu0 0
    %1371 = vperm.xlu0 %1370, %v1305
    %v1372 = vpop.permute.xlu0 %1371
    %1375 = vset.pattern.permute.xlu0 0
    %1376 = vperm.xlu0 %1375, %v1306
    %v1377 = vpop.permute.xlu0 %1376
    %1380 = vset.pattern.permute.xlu0 0
    %1381 = vperm.xlu0 %1380, %v1307
    %v1382 = vpop.permute.xlu0 %1381
    %1385 = vset.pattern.permute.xlu0 0
    %1386 = vperm.xlu0 %1385, %v1308
    %v1387 = vpop.permute.xlu0 %1386
    %1390 = vset.pattern.permute.xlu0 0
    %1391 = vperm.xlu0 %1390, %v1309
    %v1392 = vpop.permute.xlu0 %1391
    %1395 = vset.pattern.permute.xlu0 0
    %1396 = vperm.xlu0 %1395, %v1310
    %v1397 = vpop.permute.xlu0 %1396
    %1400 = vset.pattern.permute.xlu0 0
    %1401 = vperm.xlu0 %1400, %v1311
    %v1402 = vpop.permute.xlu0 %1401
    %1405 = vset.pattern.permute.xlu0 0
    %1406 = vperm.xlu0 %1405, %v1312
    %v1407 = vpop.permute.xlu0 %1406
    %1410 = vset.pattern.permute.xlu0 0
    %1411 = vperm.xlu0 %1410, %v1313
    %v1412 = vpop.permute.xlu0 %1411
    %1415 = vset.pattern.permute.xlu0 0
    %1416 = vperm.xlu0 %1415, %v1314
    %v1417 = vpop.permute.xlu0 %1416
    %1420 = vset.pattern.permute.xlu0 0
    %1421 = vperm.xlu0 %1420, %v1315
    %v1422 = vpop.permute.xlu0 %1421
    %1425 = vset.pattern.permute.xlu0 0
    %1426 = vperm.xlu0 %1425, %v1316
    %v1427 = vpop.permute.xlu0 %1426
    %1430 = vset.pattern.permute.xlu0 0
    %1431 = vperm.xlu0 %1430, %v1317
    %v1432 = vpop.permute.xlu0 %1431
    %1435 = vset.pattern.permute.xlu0 0
    %1436 = vperm.xlu0 %1435, %v1318
    %v1437 = vpop.permute.xlu0 %1436
    %1440 = vset.pattern.permute.xlu0 0
    %1441 = vperm.xlu0 %1440, %v1319
    %v1442 = vpop.permute.xlu0 %1441
    %1445 = vset.pattern.permute.xlu0 0
    %1446 = vperm.xlu0 %1445, %v1320
    %v1447 = vpop.permute.xlu0 %1446
    %v1449 = vsub.f32 %v760, %v1372
    %v1450 = vsub.f32 %v761, %v1377
    %v1451 = vsub.f32 %v762, %v1382
    %v1452 = vsub.f32 %v763, %v1387
    %v1453 = vsub.f32 %v764, %v1392
    %v1454 = vsub.f32 %v765, %v1397
    %v1455 = vsub.f32 %v766, %v1402
    %v1456 = vsub.f32 %v767, %v1407
    %v1457 = vsub.f32 %v768, %v1412
    %v1458 = vsub.f32 %v769, %v1417
    %v1459 = vsub.f32 %v770, %v1422
    %v1460 = vsub.f32 %v771, %v1427
    %v1461 = vsub.f32 %v772, %v1432
    %v1462 = vsub.f32 %v773, %v1437
    %v1463 = vsub.f32 %v774, %v1442
    %v1464 = vsub.f32 %v775, %v1447
    %v1465 = vmul.f32 %v1449, 1.442695
    %v1466 = vpow.pop %v1465
    %v1467 = vmul.f32 %v1450, 1.442695
    %v1468 = vpow.pop %v1467
    %v1469 = vmul.f32 %v1451, 1.442695
    %v1470 = vpow.pop %v1469
    %v1471 = vmul.f32 %v1452, 1.442695
    %v1472 = vpow.pop %v1471
    %v1473 = vmul.f32 %v1453, 1.442695
    %v1474 = vpow.pop %v1473
    %v1475 = vmul.f32 %v1454, 1.442695
    %v1476 = vpow.pop %v1475
    %v1477 = vmul.f32 %v1455, 1.442695
    %v1478 = vpow.pop %v1477
    %v1479 = vmul.f32 %v1456, 1.442695
    %v1480 = vpow.pop %v1479
    %v1481 = vmul.f32 %v1457, 1.442695
    %v1482 = vpow.pop %v1481
    %v1483 = vmul.f32 %v1458, 1.442695
    %v1484 = vpow.pop %v1483
    %v1485 = vmul.f32 %v1459, 1.442695
    %v1486 = vpow.pop %v1485
    %v1487 = vmul.f32 %v1460, 1.442695
    %v1488 = vpow.pop %v1487
    %v1489 = vmul.f32 %v1461, 1.442695
    %v1490 = vpow.pop %v1489
    %v1491 = vmul.f32 %v1462, 1.442695
    %v1492 = vpow.pop %v1491
    %v1493 = vmul.f32 %v1463, 1.442695
    %v1494 = vpow.pop %v1493
    %v1495 = vmul.f32 %v1464, 1.442695
    %v1496 = vpow.pop %v1495
    %v1497 = vsel %vm712, %v1466, 0.0
    %v1498 = vsel %vm713, %v1468, 0.0
    %v1499 = vsel %vm714, %v1470, 0.0
    %v1500 = vsel %vm715, %v1472, 0.0
    %v1501 = vsel %vm716, %v1474, 0.0
    %v1502 = vsel %vm717, %v1476, 0.0
    %v1503 = vsel %vm718, %v1478, 0.0
    %v1504 = vsel %vm719, %v1480, 0.0
    %v1505 = vsel %vm720, %v1482, 0.0
    %v1506 = vsel %vm721, %v1484, 0.0
    %v1507 = vsel %vm722, %v1486, 0.0
    %v1508 = vsel %vm723, %v1488, 0.0
    %v1509 = vsel %vm724, %v1490, 0.0
    %v1510 = vsel %vm725, %v1492, 0.0
    %v1511 = vsel %vm726, %v1494, 0.0
    %v1512 = vsel %vm727, %v1496, 0.0
    %v1513 = vld [vmem:[#allocation6] sm:$0xff]
    %v1514 = vld [vmem:[#allocation6 + $0x8] sm:$0xff]
    %v1515 = vld [vmem:[#allocation6 + $0x10] sm:$0xff]
    %v1516 = vld [vmem:[#allocation6 + $0x18] sm:$0xff]
    %v1517 = vld [vmem:[#allocation6 + $0x20] sm:$0xff]
    %v1518 = vld [vmem:[#allocation6 + $0x28] sm:$0xff]
    %v1519 = vld [vmem:[#allocation6 + $0x30] sm:$0xff]
    %v1520 = vld [vmem:[#allocation6 + $0x38] sm:$0xff]
    %v1521 = vld [vmem:[#allocation6 + $0x40] sm:$0xff]
    %v1522 = vld [vmem:[#allocation6 + $0x48] sm:$0xff]
    %v1523 = vld [vmem:[#allocation6 + $0x50] sm:$0xff]
    %v1524 = vld [vmem:[#allocation6 + $0x58] sm:$0xff]
    %v1525 = vld [vmem:[#allocation6 + $0x60] sm:$0xff]
    %v1526 = vld [vmem:[#allocation6 + $0x68] sm:$0xff]
    %v1527 = vld [vmem:[#allocation6 + $0x70] sm:$0xff]
    %v1528 = vld [vmem:[#allocation6 + $0x78] sm:$0xff]
    %v1529 = vmul.f32 %v1513, %v1338
    %v1530 = vmul.f32 %v1514, %v1340
    %v1531 = vmul.f32 %v1515, %v1342
    %v1532 = vmul.f32 %v1516, %v1344
    %v1533 = vmul.f32 %v1517, %v1346
    %v1534 = vmul.f32 %v1518, %v1348
    %v1535 = vmul.f32 %v1519, %v1350
    %v1536 = vmul.f32 %v1520, %v1352
    %v1537 = vmul.f32 %v1521, %v1354
    %v1538 = vmul.f32 %v1522, %v1356
    %v1539 = vmul.f32 %v1523, %v1358
    %v1540 = vmul.f32 %v1524, %v1360
    %v1541 = vmul.f32 %v1525, %v1362
    %v1542 = vmul.f32 %v1526, %v1364
    %v1543 = vmul.f32 %v1527, %v1366
    %v1544 = vmul.f32 %v1528, %v1368
    %1545 = vadd.xlane.f32.xlu0 %v1497
    %v1546 = vpop.xlane.xlu0 %1545
    %1547 = vadd.xlane.f32.xlu0 %v1498
    %v1548 = vpop.xlane.xlu0 %1547
    %1549 = vadd.xlane.f32.xlu0 %v1499
    %v1550 = vpop.xlane.xlu0 %1549
    %1551 = vadd.xlane.f32.xlu0 %v1500
    %v1552 = vpop.xlane.xlu0 %1551
    %1553 = vadd.xlane.f32.xlu0 %v1501
    %v1554 = vpop.xlane.xlu0 %1553
    %1555 = vadd.xlane.f32.xlu0 %v1502
    %v1556 = vpop.xlane.xlu0 %1555
    %1557 = vadd.xlane.f32.xlu0 %v1503
    %v1558 = vpop.xlane.xlu0 %1557
    %1559 = vadd.xlane.f32.xlu0 %v1504
    %v1560 = vpop.xlane.xlu0 %1559
    %1561 = vadd.xlane.f32.xlu0 %v1505
    %v1562 = vpop.xlane.xlu0 %1561
    %1563 = vadd.xlane.f32.xlu0 %v1506
    %v1564 = vpop.xlane.xlu0 %1563
    %1565 = vadd.xlane.f32.xlu0 %v1507
    %v1566 = vpop.xlane.xlu0 %1565
    %1567 = vadd.xlane.f32.xlu0 %v1508
    %v1568 = vpop.xlane.xlu0 %1567
    %1569 = vadd.xlane.f32.xlu0 %v1509
    %v1570 = vpop.xlane.xlu0 %1569
    %1571 = vadd.xlane.f32.xlu0 %v1510
    %v1572 = vpop.xlane.xlu0 %1571
    %1573 = vadd.xlane.f32.xlu0 %v1511
    %v1574 = vpop.xlane.xlu0 %1573
    %1575 = vadd.xlane.f32.xlu0 %v1512
    %v1576 = vpop.xlane.xlu0 %1575
    %v1577 = vadd.f32 %v1529, %v1546
    %v1578 = vadd.f32 %v1530, %v1548
    %v1579 = vadd.f32 %v1531, %v1550
    %v1580 = vadd.f32 %v1532, %v1552
    %v1581 = vadd.f32 %v1533, %v1554
    %v1582 = vadd.f32 %v1534, %v1556
    %v1583 = vadd.f32 %v1535, %v1558
    %v1584 = vadd.f32 %v1536, %v1560
    %v1585 = vadd.f32 %v1537, %v1562
    %v1586 = vadd.f32 %v1538, %v1564
    %v1587 = vadd.f32 %v1539, %v1566
    %v1588 = vadd.f32 %v1540, %v1568
    %v1589 = vadd.f32 %v1541, %v1570
    %v1590 = vadd.f32 %v1542, %v1572
    %v1591 = vadd.f32 %v1543, %v1574
    %v1592 = vadd.f32 %v1544, %v1576
    %1593 = vst.msk [vmem:[#allocation6] sm:$0xff] %vm1112, %v1577
    %1594 = vst.msk [vmem:[#allocation6 + $0x8] sm:$0xff] %vm1112, %v1578
    %1595 = vst.msk [vmem:[#allocation6 + $0x10] sm:$0xff] %vm1112, %v1579
    %1596 = vst.msk [vmem:[#allocation6 + $0x18] sm:$0xff] %vm1112, %v1580
    %1597 = vst.msk [vmem:[#allocation6 + $0x20] sm:$0xff] %vm1112, %v1581
    %1598 = vst.msk [vmem:[#allocation6 + $0x28] sm:$0xff] %vm1112, %v1582
    %1599 = vst.msk [vmem:[#allocation6 + $0x30] sm:$0xff] %vm1112, %v1583
    %1600 = vst.msk [vmem:[#allocation6 + $0x38] sm:$0xff] %vm1112, %v1584
    %1601 = vst.msk [vmem:[#allocation6 + $0x40] sm:$0xff] %vm1112, %v1585
    %1602 = vst.msk [vmem:[#allocation6 + $0x48] sm:$0xff] %vm1112, %v1586
    %1603 = vst.msk [vmem:[#allocation6 + $0x50] sm:$0xff] %vm1112, %v1587
    %1604 = vst.msk [vmem:[#allocation6 + $0x58] sm:$0xff] %vm1112, %v1588
    %1605 = vst.msk [vmem:[#allocation6 + $0x60] sm:$0xff] %vm1112, %v1589
    %1606 = vst.msk [vmem:[#allocation6 + $0x68] sm:$0xff] %vm1112, %v1590
    %1607 = vst.msk [vmem:[#allocation6 + $0x70] sm:$0xff] %vm1112, %v1591
    %1608 = vst.msk [vmem:[#allocation6 + $0x78] sm:$0xff] %vm1112, %v1592
    %v1609 = vld [vmem:[#allocation7] sm:$0xff]
    %v1610 = vld [vmem:[#allocation7 + $0x8] sm:$0xff]
    %v1611 = vld [vmem:[#allocation7 + $0x10] sm:$0xff]
    %v1612 = vld [vmem:[#allocation7 + $0x18] sm:$0xff]
    %v1613 = vld [vmem:[#allocation7 + $0x20] sm:$0xff]
    %v1614 = vld [vmem:[#allocation7 + $0x28] sm:$0xff]
    %v1615 = vld [vmem:[#allocation7 + $0x30] sm:$0xff]
    %v1616 = vld [vmem:[#allocation7 + $0x38] sm:$0xff]
    %v1617 = vld [vmem:[#allocation7 + $0x40] sm:$0xff]
    %v1618 = vld [vmem:[#allocation7 + $0x48] sm:$0xff]
    %v1619 = vld [vmem:[#allocation7 + $0x50] sm:$0xff]
    %v1620 = vld [vmem:[#allocation7 + $0x58] sm:$0xff]
    %v1621 = vld [vmem:[#allocation7 + $0x60] sm:$0xff]
    %v1622 = vld [vmem:[#allocation7 + $0x68] sm:$0xff]
    %v1623 = vld [vmem:[#allocation7 + $0x70] sm:$0xff]
    %v1624 = vld [vmem:[#allocation7 + $0x78] sm:$0xff]
    %v1625 = vmul.f32 %v1609, %v1338
    %v1626 = vmul.f32 %v1610, %v1340
    %v1627 = vmul.f32 %v1611, %v1342
    %v1628 = vmul.f32 %v1612, %v1344
    %v1629 = vmul.f32 %v1613, %v1346
    %v1630 = vmul.f32 %v1614, %v1348
    %v1631 = vmul.f32 %v1615, %v1350
    %v1632 = vmul.f32 %v1616, %v1352
    %v1633 = vmul.f32 %v1617, %v1354
    %v1634 = vmul.f32 %v1618, %v1356
    %v1635 = vmul.f32 %v1619, %v1358
    %v1636 = vmul.f32 %v1620, %v1360
    %v1637 = vmul.f32 %v1621, %v1362
    %v1638 = vmul.f32 %v1622, %v1364
    %v1639 = vmul.f32 %v1623, %v1366
    %v1640 = vmul.f32 %v1624, %v1368
    %v1641 = vmul.f32 %v481, %v1497
    %v1642 = vmul.f32 %v488, %v1498
    %v1643 = vmul.f32 %v495, %v1499
    %v1644 = vmul.f32 %v502, %v1500
    %v1645 = vmul.f32 %v509, %v1501
    %v1646 = vmul.f32 %v516, %v1502
    %v1647 = vmul.f32 %v523, %v1503
    %v1648 = vmul.f32 %v530, %v1504
    %v1649 = vmul.f32 %v537, %v1505
    %v1650 = vmul.f32 %v544, %v1506
    %v1651 = vmul.f32 %v551, %v1507
    %v1652 = vmul.f32 %v558, %v1508
    %v1653 = vmul.f32 %v565, %v1509
    %v1654 = vmul.f32 %v572, %v1510
    %v1655 = vmul.f32 %v579, %v1511
    %v1656 = vmul.f32 %v586, %v1512
    %1657 = vadd.xlane.f32.xlu0 %v1641
    %v1658 = vpop.xlane.xlu0 %1657
    %1659 = vadd.xlane.f32.xlu0 %v1642
    %v1660 = vpop.xlane.xlu0 %1659
    %1661 = vadd.xlane.f32.xlu0 %v1643
    %v1662 = vpop.xlane.xlu0 %1661
    %1663 = vadd.xlane.f32.xlu0 %v1644
    %v1664 = vpop.xlane.xlu0 %1663
    %1665 = vadd.xlane.f32.xlu0 %v1645
    %v1666 = vpop.xlane.xlu0 %1665
    %1667 = vadd.xlane.f32.xlu0 %v1646
    %v1668 = vpop.xlane.xlu0 %1667
    %1669 = vadd.xlane.f32.xlu0 %v1647
    %v1670 = vpop.xlane.xlu0 %1669
    %1671 = vadd.xlane.f32.xlu0 %v1648
    %v1672 = vpop.xlane.xlu0 %1671
    %1673 = vadd.xlane.f32.xlu0 %v1649
    %v1674 = vpop.xlane.xlu0 %1673
    %1675 = vadd.xlane.f32.xlu0 %v1650
    %v1676 = vpop.xlane.xlu0 %1675
    %1677 = vadd.xlane.f32.xlu0 %v1651
    %v1678 = vpop.xlane.xlu0 %1677
    %1679 = vadd.xlane.f32.xlu0 %v1652
    %v1680 = vpop.xlane.xlu0 %1679
    %1681 = vadd.xlane.f32.xlu0 %v1653
    %v1682 = vpop.xlane.xlu0 %1681
    %1683 = vadd.xlane.f32.xlu0 %v1654
    %v1684 = vpop.xlane.xlu0 %1683
    %1685 = vadd.xlane.f32.xlu0 %v1655
    %v1686 = vpop.xlane.xlu0 %1685
    %1687 = vadd.xlane.f32.xlu0 %v1656
    %v1688 = vpop.xlane.xlu0 %1687
    %v1689 = vadd.f32 %v1625, %v1658
    %v1690 = vadd.f32 %v1626, %v1660
    %v1691 = vadd.f32 %v1627, %v1662
    %v1692 = vadd.f32 %v1628, %v1664
    %v1693 = vadd.f32 %v1629, %v1666
    %v1694 = vadd.f32 %v1630, %v1668
    %v1695 = vadd.f32 %v1631, %v1670
    %v1696 = vadd.f32 %v1632, %v1672
    %v1697 = vadd.f32 %v1633, %v1674
    %v1698 = vadd.f32 %v1634, %v1676
    %v1699 = vadd.f32 %v1635, %v1678
    %v1700 = vadd.f32 %v1636, %v1680
    %v1701 = vadd.f32 %v1637, %v1682
    %v1702 = vadd.f32 %v1638, %v1684
    %v1703 = vadd.f32 %v1639, %v1686
    %v1704 = vadd.f32 %v1640, %v1688
    %1705 = vst.msk [vmem:[#allocation7] sm:$0xff] %vm1112, %v1689
    %1706 = vst.msk [vmem:[#allocation7 + $0x8] sm:$0xff] %vm1112, %v1690
    %1707 = vst.msk [vmem:[#allocation7 + $0x10] sm:$0xff] %vm1112, %v1691
    %1708 = vst.msk [vmem:[#allocation7 + $0x18] sm:$0xff] %vm1112, %v1692
    %1709 = vst.msk [vmem:[#allocation7 + $0x20] sm:$0xff] %vm1112, %v1693
    %1710 = vst.msk [vmem:[#allocation7 + $0x28] sm:$0xff] %vm1112, %v1694
    %1711 = vst.msk [vmem:[#allocation7 + $0x30] sm:$0xff] %vm1112, %v1695
    %1712 = vst.msk [vmem:[#allocation7 + $0x38] sm:$0xff] %vm1112, %v1696
    %1713 = vst.msk [vmem:[#allocation7 + $0x40] sm:$0xff] %vm1112, %v1697
    %1714 = vst.msk [vmem:[#allocation7 + $0x48] sm:$0xff] %vm1112, %v1698
    %1715 = vst.msk [vmem:[#allocation7 + $0x50] sm:$0xff] %vm1112, %v1699
    %1716 = vst.msk [vmem:[#allocation7 + $0x58] sm:$0xff] %vm1112, %v1700
    %1717 = vst.msk [vmem:[#allocation7 + $0x60] sm:$0xff] %vm1112, %v1701
    %1718 = vst.msk [vmem:[#allocation7 + $0x68] sm:$0xff] %vm1112, %v1702
    %1719 = vst.msk [vmem:[#allocation7 + $0x70] sm:$0xff] %vm1112, %v1703
    %1720 = vst.msk [vmem:[#allocation7 + $0x78] sm:$0xff] %vm1112, %v1704
    %1721 = vst.msk [vmem:[#allocation5] sm:$0xff] %vm1112, %v1305
    %1722 = vst.msk [vmem:[#allocation5 + $0x8] sm:$0xff] %vm1112, %v1306
    %1723 = vst.msk [vmem:[#allocation5 + $0x10] sm:$0xff] %vm1112, %v1307
    %1724 = vst.msk [vmem:[#allocation5 + $0x18] sm:$0xff] %vm1112, %v1308
    %1725 = vst.msk [vmem:[#allocation5 + $0x20] sm:$0xff] %vm1112, %v1309
    %1726 = vst.msk [vmem:[#allocation5 + $0x28] sm:$0xff] %vm1112, %v1310
    %1727 = vst.msk [vmem:[#allocation5 + $0x30] sm:$0xff] %vm1112, %v1311
    %1728 = vst.msk [vmem:[#allocation5 + $0x38] sm:$0xff] %vm1112, %v1312
    %1729 = vst.msk [vmem:[#allocation5 + $0x40] sm:$0xff] %vm1112, %v1313
    %1730 = vst.msk [vmem:[#allocation5 + $0x48] sm:$0xff] %vm1112, %v1314
    %1731 = vst.msk [vmem:[#allocation5 + $0x50] sm:$0xff] %vm1112, %v1315
    %1732 = vst.msk [vmem:[#allocation5 + $0x58] sm:$0xff] %vm1112, %v1316
    %1733 = vst.msk [vmem:[#allocation5 + $0x60] sm:$0xff] %vm1112, %v1317
    %1734 = vst.msk [vmem:[#allocation5 + $0x68] sm:$0xff] %vm1112, %v1318
    %1735 = vst.msk [vmem:[#allocation5 + $0x70] sm:$0xff] %vm1112, %v1319
    %1736 = vst.msk [vmem:[#allocation5 + $0x78] sm:$0xff] %vm1112, %v1320
    // Predicated region
    $region34: #{tpu_custom_call.1} parent=1 // pred_check
      %p1737 = pneg %p30
    $region35: #{tpu_custom_call.1} parent=1 // pred_check_branch
      %1739 = sbr.rel (%p1737) target = $region37
    $region36: #{tpu_custom_call.1} parent=1 // pred_region
      %v1740 = vld [vmem:[#allocation4] sm:$0xff]
      %v1741 = vld [vmem:[#allocation4 + $0x8] sm:$0xff]
      %v1742 = vld [vmem:[#allocation4 + $0x10] sm:$0xff]
      %v1743 = vld [vmem:[#allocation4 + $0x18] sm:$0xff]
      %v1744 = vld [vmem:[#allocation4 + $0x20] sm:$0xff]
      %v1745 = vld [vmem:[#allocation4 + $0x28] sm:$0xff]
      %v1746 = vld [vmem:[#allocation4 + $0x30] sm:$0xff]
      %v1747 = vld [vmem:[#allocation4 + $0x38] sm:$0xff]
      %v1748 = vld [vmem:[#allocation4 + $0x40] sm:$0xff]
      %v1749 = vld [vmem:[#allocation4 + $0x48] sm:$0xff]
      %v1750 = vld [vmem:[#allocation4 + $0x50] sm:$0xff]
      %v1751 = vld [vmem:[#allocation4 + $0x58] sm:$0xff]
      %v1752 = vld [vmem:[#allocation4 + $0x60] sm:$0xff]
      %v1753 = vld [vmem:[#allocation4 + $0x68] sm:$0xff]
      %v1754 = vld [vmem:[#allocation4 + $0x70] sm:$0xff]
      %v1755 = vld [vmem:[#allocation4 + $0x78] sm:$0xff]
      %v1756 = vld [vmem:[#allocation3] sm:$0xff]
      %v1757 = vld [vmem:[#allocation3 + $0x8] sm:$0xff]
      %v1758 = vld [vmem:[#allocation3 + $0x10] sm:$0xff]
      %v1759 = vld [vmem:[#allocation3 + $0x18] sm:$0xff]
      %v1760 = vld [vmem:[#allocation3 + $0x20] sm:$0xff]
      %v1761 = vld [vmem:[#allocation3 + $0x28] sm:$0xff]
      %v1762 = vld [vmem:[#allocation3 + $0x30] sm:$0xff]
      %v1763 = vld [vmem:[#allocation3 + $0x38] sm:$0xff]
      %v1764 = vld [vmem:[#allocation3 + $0x40] sm:$0xff]
      %v1765 = vld [vmem:[#allocation3 + $0x48] sm:$0xff]
      %v1766 = vld [vmem:[#allocation3 + $0x50] sm:$0xff]
      %v1767 = vld [vmem:[#allocation3 + $0x58] sm:$0xff]
      %v1768 = vld [vmem:[#allocation3 + $0x60] sm:$0xff]
      %v1769 = vld [vmem:[#allocation3 + $0x68] sm:$0xff]
      %v1770 = vld [vmem:[#allocation3 + $0x70] sm:$0xff]
      %v1771 = vld [vmem:[#allocation3 + $0x78] sm:$0xff]
      %v1772 = vadd.f32 %v1756, 1e-06
      %v1773 = vadd.f32 %v1757, 1e-06
      %v1774 = vadd.f32 %v1758, 1e-06
      %v1775 = vadd.f32 %v1759, 1e-06
      %v1776 = vadd.f32 %v1760, 1e-06
      %v1777 = vadd.f32 %v1761, 1e-06
      %v1778 = vadd.f32 %v1762, 1e-06
      %v1779 = vadd.f32 %v1763, 1e-06
      %v1780 = vadd.f32 %v1764, 1e-06
      %v1781 = vadd.f32 %v1765, 1e-06
      %v1782 = vadd.f32 %v1766, 1e-06
      %v1783 = vadd.f32 %v1767, 1e-06
      %v1784 = vadd.f32 %v1768, 1e-06
      %v1785 = vadd.f32 %v1769, 1e-06
      %v1786 = vadd.f32 %v1770, 1e-06
      %v1787 = vadd.f32 %v1771, 1e-06
      %v1788 = vrcp.pop %v1772
      %v1789 = vrcp.pop %v1773
      %v1790 = vrcp.pop %v1774
      %v1791 = vrcp.pop %v1775
      %v1792 = vrcp.pop %v1776
      %v1793 = vrcp.pop %v1777
      %v1794 = vrcp.pop %v1778
      %v1795 = vrcp.pop %v1779
      %v1796 = vrcp.pop %v1780
      %v1797 = vrcp.pop %v1781
      %v1798 = vrcp.pop %v1782
      %v1799 = vrcp.pop %v1783
      %v1800 = vrcp.pop %v1784
      %v1801 = vrcp.pop %v1785
      %v1802 = vrcp.pop %v1786
      %v1803 = vrcp.pop %v1787
      %v1804 = vmul.f32 %v1740, %v1788
      %v1805 = vmul.f32 %v1741, %v1789
      %v1806 = vmul.f32 %v1742, %v1790
      %v1807 = vmul.f32 %v1743, %v1791
      %v1808 = vmul.f32 %v1744, %v1792
      %v1809 = vmul.f32 %v1745, %v1793
      %v1810 = vmul.f32 %v1746, %v1794
      %v1811 = vmul.f32 %v1747, %v1795
      %v1812 = vmul.f32 %v1748, %v1796
      %v1813 = vmul.f32 %v1749, %v1797
      %v1814 = vmul.f32 %v1750, %v1798
      %v1815 = vmul.f32 %v1751, %v1799
      %v1816 = vmul.f32 %v1752, %v1800
      %v1817 = vmul.f32 %v1753, %v1801
      %v1818 = vmul.f32 %v1754, %v1802
      %v1819 = vmul.f32 %v1755, %v1803
      %v1820 = vld [vmem:[#allocation7] sm:$0xff]
      %v1821 = vld [vmem:[#allocation7 + $0x8] sm:$0xff]
      %v1822 = vld [vmem:[#allocation7 + $0x10] sm:$0xff]
      %v1823 = vld [vmem:[#allocation7 + $0x18] sm:$0xff]
      %v1824 = vld [vmem:[#allocation7 + $0x20] sm:$0xff]
      %v1825 = vld [vmem:[#allocation7 + $0x28] sm:$0xff]
      %v1826 = vld [vmem:[#allocation7 + $0x30] sm:$0xff]
      %v1827 = vld [vmem:[#allocation7 + $0x38] sm:$0xff]
      %v1828 = vld [vmem:[#allocation7 + $0x40] sm:$0xff]
      %v1829 = vld [vmem:[#allocation7 + $0x48] sm:$0xff]
      %v1830 = vld [vmem:[#allocation7 + $0x50] sm:$0xff]
      %v1831 = vld [vmem:[#allocation7 + $0x58] sm:$0xff]
      %v1832 = vld [vmem:[#allocation7 + $0x60] sm:$0xff]
      %v1833 = vld [vmem:[#allocation7 + $0x68] sm:$0xff]
      %v1834 = vld [vmem:[#allocation7 + $0x70] sm:$0xff]
      %v1835 = vld [vmem:[#allocation7 + $0x78] sm:$0xff]
      %v1836 = vld [vmem:[#allocation6] sm:$0xff]
      %v1837 = vld [vmem:[#allocation6 + $0x8] sm:$0xff]
      %v1838 = vld [vmem:[#allocation6 + $0x10] sm:$0xff]
      %v1839 = vld [vmem:[#allocation6 + $0x18] sm:$0xff]
      %v1840 = vld [vmem:[#allocation6 + $0x20] sm:$0xff]
      %v1841 = vld [vmem:[#allocation6 + $0x28] sm:$0xff]
      %v1842 = vld [vmem:[#allocation6 + $0x30] sm:$0xff]
      %v1843 = vld [vmem:[#allocation6 + $0x38] sm:$0xff]
      %v1844 = vld [vmem:[#allocation6 + $0x40] sm:$0xff]
      %v1845 = vld [vmem:[#allocation6 + $0x48] sm:$0xff]
      %v1846 = vld [vmem:[#allocation6 + $0x50] sm:$0xff]
      %v1847 = vld [vmem:[#allocation6 + $0x58] sm:$0xff]
      %v1848 = vld [vmem:[#allocation6 + $0x60] sm:$0xff]
      %v1849 = vld [vmem:[#allocation6 + $0x68] sm:$0xff]
      %v1850 = vld [vmem:[#allocation6 + $0x70] sm:$0xff]
      %v1851 = vld [vmem:[#allocation6 + $0x78] sm:$0xff]
      %v1852 = vadd.f32 %v1836, 1e-06
      %v1853 = vadd.f32 %v1837, 1e-06
      %v1854 = vadd.f32 %v1838, 1e-06
      %v1855 = vadd.f32 %v1839, 1e-06
      %v1856 = vadd.f32 %v1840, 1e-06
      %v1857 = vadd.f32 %v1841, 1e-06
      %v1858 = vadd.f32 %v1842, 1e-06
      %v1859 = vadd.f32 %v1843, 1e-06
      %v1860 = vadd.f32 %v1844, 1e-06
      %v1861 = vadd.f32 %v1845, 1e-06
      %v1862 = vadd.f32 %v1846, 1e-06
      %v1863 = vadd.f32 %v1847, 1e-06
      %v1864 = vadd.f32 %v1848, 1e-06
      %v1865 = vadd.f32 %v1849, 1e-06
      %v1866 = vadd.f32 %v1850, 1e-06
      %v1867 = vadd.f32 %v1851, 1e-06
      %v1868 = vrcp.pop %v1852
      %v1869 = vrcp.pop %v1853
      %v1870 = vrcp.pop %v1854
      %v1871 = vrcp.pop %v1855
      %v1872 = vrcp.pop %v1856
      %v1873 = vrcp.pop %v1857
      %v1874 = vrcp.pop %v1858
      %v1875 = vrcp.pop %v1859
      %v1876 = vrcp.pop %v1860
      %v1877 = vrcp.pop %v1861
      %v1878 = vrcp.pop %v1862
      %v1879 = vrcp.pop %v1863
      %v1880 = vrcp.pop %v1864
      %v1881 = vrcp.pop %v1865
      %v1882 = vrcp.pop %v1866
      %v1883 = vrcp.pop %v1867
      %v1884 = vmul.f32 %v1820, %v1868
      %v1885 = vmul.f32 %v1821, %v1869
      %v1886 = vmul.f32 %v1822, %v1870
      %v1887 = vmul.f32 %v1823, %v1871
      %v1888 = vmul.f32 %v1824, %v1872
      %v1889 = vmul.f32 %v1825, %v1873
      %v1890 = vmul.f32 %v1826, %v1874
      %v1891 = vmul.f32 %v1827, %v1875
      %v1892 = vmul.f32 %v1828, %v1876
      %v1893 = vmul.f32 %v1829, %v1877
      %v1894 = vmul.f32 %v1830, %v1878
      %v1895 = vmul.f32 %v1831, %v1879
      %v1896 = vmul.f32 %v1832, %v1880
      %v1897 = vmul.f32 %v1833, %v1881
      %v1898 = vmul.f32 %v1834, %v1882
      %v1899 = vmul.f32 %v1835, %v1883
      %v1900 = vsub.f32 %v1884, %v1804
      %v1901 = vsub.f32 %v1885, %v1805
      %v1902 = vsub.f32 %v1886, %v1806
      %v1903 = vsub.f32 %v1887, %v1807
      %v1904 = vsub.f32 %v1888, %v1808
      %v1905 = vsub.f32 %v1889, %v1809
      %v1906 = vsub.f32 %v1890, %v1810
      %v1907 = vsub.f32 %v1891, %v1811
      %v1908 = vsub.f32 %v1892, %v1812
      %v1909 = vsub.f32 %v1893, %v1813
      %v1910 = vsub.f32 %v1894, %v1814
      %v1911 = vsub.f32 %v1895, %v1815
      %v1912 = vsub.f32 %v1896, %v1816
      %v1913 = vsub.f32 %v1897, %v1817
      %v1914 = vsub.f32 %v1898, %v1818
      %v1915 = vsub.f32 %v1899, %v1819
      %v1916 = vmul.f32 %v1900, -1.0
      %v1917 = vmul.f32 %v1901, -1.0
      %v1918 = vmul.f32 %v1902, -1.0
      %v1919 = vmul.f32 %v1903, -1.0
      %v1920 = vmul.f32 %v1904, -1.0
      %v1921 = vmul.f32 %v1905, -1.0
      %v1922 = vmul.f32 %v1906, -1.0
      %v1923 = vmul.f32 %v1907, -1.0
      %v1924 = vmul.f32 %v1908, -1.0
      %v1925 = vmul.f32 %v1909, -1.0
      %v1926 = vmul.f32 %v1910, -1.0
      %v1927 = vmul.f32 %v1911, -1.0
      %v1928 = vmul.f32 %v1912, -1.0
      %v1929 = vmul.f32 %v1913, -1.0
      %v1930 = vmul.f32 %v1914, -1.0
      %v1931 = vmul.f32 %v1915, -1.0
      %v1932 = vmax.f32 %v1916, 0.0
      %v1933 = vmax.f32 %v1917, 0.0
      %v1934 = vmax.f32 %v1918, 0.0
      %v1935 = vmax.f32 %v1919, 0.0
      %v1936 = vmax.f32 %v1920, 0.0
      %v1937 = vmax.f32 %v1921, 0.0
      %v1938 = vmax.f32 %v1922, 0.0
      %v1939 = vmax.f32 %v1923, 0.0
      %v1940 = vmax.f32 %v1924, 0.0
      %v1941 = vmax.f32 %v1925, 0.0
      %v1942 = vmax.f32 %v1926, 0.0
      %v1943 = vmax.f32 %v1927, 0.0
      %v1944 = vmax.f32 %v1928, 0.0
      %v1945 = vmax.f32 %v1929, 0.0
      %v1946 = vmax.f32 %v1930, 0.0
      %v1947 = vmax.f32 %v1931, 0.0
      %v1948 = vand.u32 2147483647, %v1916
      %v1949 = vand.u32 2147483647, %v1917
      %v1950 = vand.u32 2147483647, %v1918
      %v1951 = vand.u32 2147483647, %v1919
      %v1952 = vand.u32 2147483647, %v1920
      %v1953 = vand.u32 2147483647, %v1921
      %v1954 = vand.u32 2147483647, %v1922
      %v1955 = vand.u32 2147483647, %v1923
      %v1956 = vand.u32 2147483647, %v1924
      %v1957 = vand.u32 2147483647, %v1925
      %v1958 = vand.u32 2147483647, %v1926
      %v1959 = vand.u32 2147483647, %v1927
      %v1960 = vand.u32 2147483647, %v1928
      %v1961 = vand.u32 2147483647, %v1929
      %v1962 = vand.u32 2147483647, %v1930
      %v1963 = vand.u32 2147483647, %v1931
      %v1964 = vsub.f32 0.0, %v1948
      %v1965 = vsub.f32 0.0, %v1949
      %v1966 = vsub.f32 0.0, %v1950
      %v1967 = vsub.f32 0.0, %v1951
      %v1968 = vsub.f32 0.0, %v1952
      %v1969 = vsub.f32 0.0, %v1953
      %v1970 = vsub.f32 0.0, %v1954
      %v1971 = vsub.f32 0.0, %v1955
      %v1972 = vsub.f32 0.0, %v1956
      %v1973 = vsub.f32 0.0, %v1957
      %v1974 = vsub.f32 0.0, %v1958
      %v1975 = vsub.f32 0.0, %v1959
      %v1976 = vsub.f32 0.0, %v1960
      %v1977 = vsub.f32 0.0, %v1961
      %v1978 = vsub.f32 0.0, %v1962
      %v1979 = vsub.f32 0.0, %v1963
      %v1980 = vmul.f32 %v1964, 1.442695
      %v1981 = vpow.pop %v1980
      %v1982 = vmul.f32 %v1965, 1.442695
      %v1983 = vpow.pop %v1982
      %v1984 = vmul.f32 %v1966, 1.442695
      %v1985 = vpow.pop %v1984
      %v1986 = vmul.f32 %v1967, 1.442695
      %v1987 = vpow.pop %v1986
      %v1988 = vmul.f32 %v1968, 1.442695
      %v1989 = vpow.pop %v1988
      %v1990 = vmul.f32 %v1969, 1.442695
      %v1991 = vpow.pop %v1990
      %v1992 = vmul.f32 %v1970, 1.442695
      %v1993 = vpow.pop %v1992
      %v1994 = vmul.f32 %v1971, 1.442695
      %v1995 = vpow.pop %v1994
      %v1996 = vmul.f32 %v1972, 1.442695
      %v1997 = vpow.pop %v1996
      %v1998 = vmul.f32 %v1973, 1.442695
      %v1999 = vpow.pop %v1998
      %v2000 = vmul.f32 %v1974, 1.442695
      %v2001 = vpow.pop %v2000
      %v2002 = vmul.f32 %v1975, 1.442695
      %v2003 = vpow.pop %v2002
      %v2004 = vmul.f32 %v1976, 1.442695
      %v2005 = vpow.pop %v2004
      %v2006 = vmul.f32 %v1977, 1.442695
      %v2007 = vpow.pop %v2006
      %v2008 = vmul.f32 %v1978, 1.442695
      %v2009 = vpow.pop %v2008
      %v2010 = vmul.f32 %v1979, 1.442695
      %v2011 = vpow.pop %v2010
      %v2012 = vadd.f32 %v1981, 1.0
      %v2013 = vlog2.pop %v2012
      %v2014 = vmul.f32 %v2013, 0.6931472
      %v2015 = vmul.f32 -0.5, %v1981
      %v2016 = vadd.f32 %v2015, 1.0
      %v2017 = vmul.f32 %v2016, %v1981
      %v2018 = vand.u32 2147483647, %v1981
      %vm2019 = vcmp.lt.f32.partialorder %v2018, 0.0004427343
      %v2020 = vsel %vm2019, %v2017, %v2014
      %v2021 = vadd.f32 %v1983, 1.0
      %v2022 = vlog2.pop %v2021
      %v2023 = vmul.f32 %v2022, 0.6931472
      %v2024 = vmul.f32 -0.5, %v1983
      %v2025 = vadd.f32 %v2024, 1.0
      %v2026 = vmul.f32 %v2025, %v1983
      %v2027 = vand.u32 2147483647, %v1983
      %vm2028 = vcmp.lt.f32.partialorder %v2027, 0.0004427343
      %v2029 = vsel %vm2028, %v2026, %v2023
      %v2030 = vadd.f32 %v1985, 1.0
      %v2031 = vlog2.pop %v2030
      %v2032 = vmul.f32 %v2031, 0.6931472
      %v2033 = vmul.f32 -0.5, %v1985
      %v2034 = vadd.f32 %v2033, 1.0
      %v2035 = vmul.f32 %v2034, %v1985
      %v2036 = vand.u32 2147483647, %v1985
      %vm2037 = vcmp.lt.f32.partialorder %v2036, 0.0004427343
      %v2038 = vsel %vm2037, %v2035, %v2032
      %v2039 = vadd.f32 %v1987, 1.0
      %v2040 = vlog2.pop %v2039
      %v2041 = vmul.f32 %v2040, 0.6931472
      %v2042 = vmul.f32 -0.5, %v1987
      %v2043 = vadd.f32 %v2042, 1.0
      %v2044 = vmul.f32 %v2043, %v1987
      %v2045 = vand.u32 2147483647, %v1987
      %vm2046 = vcmp.lt.f32.partialorder %v2045, 0.0004427343
      %v2047 = vsel %vm2046, %v2044, %v2041
      %v2048 = vadd.f32 %v1989, 1.0
      %v2049 = vlog2.pop %v2048
      %v2050 = vmul.f32 %v2049, 0.6931472
      %v2051 = vmul.f32 -0.5, %v1989
      %v2052 = vadd.f32 %v2051, 1.0
      %v2053 = vmul.f32 %v2052, %v1989
      %v2054 = vand.u32 2147483647, %v1989
      %vm2055 = vcmp.lt.f32.partialorder %v2054, 0.0004427343
      %v2056 = vsel %vm2055, %v2053, %v2050
      %v2057 = vadd.f32 %v1991, 1.0
      %v2058 = vlog2.pop %v2057
      %v2059 = vmul.f32 %v2058, 0.6931472
      %v2060 = vmul.f32 -0.5, %v1991
      %v2061 = vadd.f32 %v2060, 1.0
      %v2062 = vmul.f32 %v2061, %v1991
      %v2063 = vand.u32 2147483647, %v1991
      %vm2064 = vcmp.lt.f32.partialorder %v2063, 0.0004427343
      %v2065 = vsel %vm2064, %v2062, %v2059
      %v2066 = vadd.f32 %v1993, 1.0
      %v2067 = vlog2.pop %v2066
      %v2068 = vmul.f32 %v2067, 0.6931472
      %v2069 = vmul.f32 -0.5, %v1993
      %v2070 = vadd.f32 %v2069, 1.0
      %v2071 = vmul.f32 %v2070, %v1993
      %v2072 = vand.u32 2147483647, %v1993
      %vm2073 = vcmp.lt.f32.partialorder %v2072, 0.0004427343
      %v2074 = vsel %vm2073, %v2071, %v2068
      %v2075 = vadd.f32 %v1995, 1.0
      %v2076 = vlog2.pop %v2075
      %v2077 = vmul.f32 %v2076, 0.6931472
      %v2078 = vmul.f32 -0.5, %v1995
      %v2079 = vadd.f32 %v2078, 1.0
      %v2080 = vmul.f32 %v2079, %v1995
      %v2081 = vand.u32 2147483647, %v1995
      %vm2082 = vcmp.lt.f32.partialorder %v2081, 0.0004427343
      %v2083 = vsel %vm2082, %v2080, %v2077
      %v2084 = vadd.f32 %v1997, 1.0
      %v2085 = vlog2.pop %v2084
      %v2086 = vmul.f32 %v2085, 0.6931472
      %v2087 = vmul.f32 -0.5, %v1997
      %v2088 = vadd.f32 %v2087, 1.0
      %v2089 = vmul.f32 %v2088, %v1997
      %v2090 = vand.u32 2147483647, %v1997
      %vm2091 = vcmp.lt.f32.partialorder %v2090, 0.0004427343
      %v2092 = vsel %vm2091, %v2089, %v2086
      %v2093 = vadd.f32 %v1999, 1.0
      %v2094 = vlog2.pop %v2093
      %v2095 = vmul.f32 %v2094, 0.6931472
      %v2096 = vmul.f32 -0.5, %v1999
      %v2097 = vadd.f32 %v2096, 1.0
      %v2098 = vmul.f32 %v2097, %v1999
      %v2099 = vand.u32 2147483647, %v1999
      %vm2100 = vcmp.lt.f32.partialorder %v2099, 0.0004427343
      %v2101 = vsel %vm2100, %v2098, %v2095
      %v2102 = vadd.f32 %v2001, 1.0
      %v2103 = vlog2.pop %v2102
      %v2104 = vmul.f32 %v2103, 0.6931472
      %v2105 = vmul.f32 -0.5, %v2001
      %v2106 = vadd.f32 %v2105, 1.0
      %v2107 = vmul.f32 %v2106, %v2001
      %v2108 = vand.u32 2147483647, %v2001
      %vm2109 = vcmp.lt.f32.partialorder %v2108, 0.0004427343
      %v2110 = vsel %vm2109, %v2107, %v2104
      %v2111 = vadd.f32 %v2003, 1.0
      %v2112 = vlog2.pop %v2111
      %v2113 = vmul.f32 %v2112, 0.6931472
      %v2114 = vmul.f32 -0.5, %v2003
      %v2115 = vadd.f32 %v2114, 1.0
      %v2116 = vmul.f32 %v2115, %v2003
      %v2117 = vand.u32 2147483647, %v2003
      %vm2118 = vcmp.lt.f32.partialorder %v2117, 0.0004427343
      %v2119 = vsel %vm2118, %v2116, %v2113
      %v2120 = vadd.f32 %v2005, 1.0
      %v2121 = vlog2.pop %v2120
      %v2122 = vmul.f32 %v2121, 0.6931472
      %v2123 = vmul.f32 -0.5, %v2005
      %v2124 = vadd.f32 %v2123, 1.0
      %v2125 = vmul.f32 %v2124, %v2005
      %v2126 = vand.u32 2147483647, %v2005
      %vm2127 = vcmp.lt.f32.partialorder %v2126, 0.0004427343
      %v2128 = vsel %vm2127, %v2125, %v2122
      %v2129 = vadd.f32 %v2007, 1.0
      %v2130 = vlog2.pop %v2129
      %v2131 = vmul.f32 %v2130, 0.6931472
      %v2132 = vmul.f32 -0.5, %v2007
      %v2133 = vadd.f32 %v2132, 1.0
      %v2134 = vmul.f32 %v2133, %v2007
      %v2135 = vand.u32 2147483647, %v2007
      %vm2136 = vcmp.lt.f32.partialorder %v2135, 0.0004427343
      %v2137 = vsel %vm2136, %v2134, %v2131
      %v2138 = vadd.f32 %v2009, 1.0
      %v2139 = vlog2.pop %v2138
      %v2140 = vmul.f32 %v2139, 0.6931472
      %v2141 = vmul.f32 -0.5, %v2009
      %v2142 = vadd.f32 %v2141, 1.0
      %v2143 = vmul.f32 %v2142, %v2009
      %v2144 = vand.u32 2147483647, %v2009
      %vm2145 = vcmp.lt.f32.partialorder %v2144, 0.0004427343
      %v2146 = vsel %vm2145, %v2143, %v2140
      %v2147 = vadd.f32 %v2011, 1.0
      %v2148 = vlog2.pop %v2147
      %v2149 = vmul.f32 %v2148, 0.6931472
      %v2150 = vmul.f32 -0.5, %v2011
      %v2151 = vadd.f32 %v2150, 1.0
      %v2152 = vmul.f32 %v2151, %v2011
      %v2153 = vand.u32 2147483647, %v2011
      %vm2154 = vcmp.lt.f32.partialorder %v2153, 0.0004427343
      %v2155 = vsel %vm2154, %v2152, %v2149
      %v2156 = vadd.f32 %v1932, %v2020
      %v2157 = vadd.f32 %v1933, %v2029
      %v2158 = vadd.f32 %v1934, %v2038
      %v2159 = vadd.f32 %v1935, %v2047
      %v2160 = vadd.f32 %v1936, %v2056
      %v2161 = vadd.f32 %v1937, %v2065
      %v2162 = vadd.f32 %v1938, %v2074
      %v2163 = vadd.f32 %v1939, %v2083
      %v2164 = vadd.f32 %v1940, %v2092
      %v2165 = vadd.f32 %v1941, %v2101
      %v2166 = vadd.f32 %v1942, %v2110
      %v2167 = vadd.f32 %v1943, %v2119
      %v2168 = vadd.f32 %v1944, %v2128
      %v2169 = vadd.f32 %v1945, %v2137
      %v2170 = vadd.f32 %v1946, %v2146
      %v2171 = vadd.f32 %v1947, %v2155
      %v2172 = vlaneseq
      %v2173 = vshrl.u32 %v2172, 7
      %v2174 = vadd.s32 %v2173, 8
      %v2175 = vadd.s32 %v2173, 16
      %v2176 = vadd.s32 %v2173, 24
      %v2177 = vadd.s32 %v2173, 32
      %v2178 = vadd.s32 %v2173, 40
      %v2179 = vadd.s32 %v2173, 48
      %v2180 = vadd.s32 %v2173, 56
      %v2181 = vadd.s32 %v2173, 64
      %v2182 = vadd.s32 %v2173, 72
      %v2183 = vadd.s32 %v2173, 80
      %v2184 = vadd.s32 %v2173, 88
      %v2185 = vadd.s32 %v2173, 96
      %v2186 = vadd.s32 %v2173, 104
      %v2187 = vadd.s32 %v2173, 112
      %v2188 = vadd.s32 %v2173, 120
      %s2189 = smul.u32 0, 128
      %v2190 = vstv %s2189
      %v2191 = vadd.s32 %v2173, %v2190
      %v2192 = vadd.s32 %v2174, %v2190
      %v2193 = vadd.s32 %v2175, %v2190
      %v2194 = vadd.s32 %v2176, %v2190
      %v2195 = vadd.s32 %v2177, %v2190
      %v2196 = vadd.s32 %v2178, %v2190
      %v2197 = vadd.s32 %v2179, %v2190
      %v2198 = vadd.s32 %v2180, %v2190
      %v2199 = vadd.s32 %v2181, %v2190
      %v2200 = vadd.s32 %v2182, %v2190
      %v2201 = vadd.s32 %v2183, %v2190
      %v2202 = vadd.s32 %v2184, %v2190
      %v2203 = vadd.s32 %v2185, %v2190
      %v2204 = vadd.s32 %v2186, %v2190
      %v2205 = vadd.s32 %v2187, %v2190
      %v2206 = vadd.s32 %v2188, %v2190
      %vm2207 = vcmp.lt.s32.totalorder %v2191, 8
      %vm2208 = vcmp.lt.s32.totalorder %v2192, 8
      %vm2209 = vcmp.lt.s32.totalorder %v2193, 8
      %vm2210 = vcmp.lt.s32.totalorder %v2194, 8
      %vm2211 = vcmp.lt.s32.totalorder %v2195, 8
      %vm2212 = vcmp.lt.s32.totalorder %v2196, 8
      %vm2213 = vcmp.lt.s32.totalorder %v2197, 8
      %vm2214 = vcmp.lt.s32.totalorder %v2198, 8
      %vm2215 = vcmp.lt.s32.totalorder %v2199, 8
      %vm2216 = vcmp.lt.s32.totalorder %v2200, 8
      %vm2217 = vcmp.lt.s32.totalorder %v2201, 8
      %vm2218 = vcmp.lt.s32.totalorder %v2202, 8
      %vm2219 = vcmp.lt.s32.totalorder %v2203, 8
      %vm2220 = vcmp.lt.s32.totalorder %v2204, 8
      %vm2221 = vcmp.lt.s32.totalorder %v2205, 8
      %vm2222 = vcmp.lt.s32.totalorder %v2206, 8
      %v2223 = vsel %vm2207, 1, 0
      %v2224 = vsel %vm2208, 1, 0
      %v2225 = vsel %vm2209, 1, 0
      %v2226 = vsel %vm2210, 1, 0
      %v2227 = vsel %vm2211, 1, 0
      %v2228 = vsel %vm2212, 1, 0
      %v2229 = vsel %vm2213, 1, 0
      %v2230 = vsel %vm2214, 1, 0
      %v2231 = vsel %vm2215, 1, 0
      %v2232 = vsel %vm2216, 1, 0
      %v2233 = vsel %vm2217, 1, 0
      %v2234 = vsel %vm2218, 1, 0
      %v2235 = vsel %vm2219, 1, 0
      %v2236 = vsel %vm2220, 1, 0
      %v2237 = vsel %vm2221, 1, 0
      %v2238 = vsel %vm2222, 1, 0
      %v2239 = vcvt.s32.f32 %v2223
      %v2240 = vcvt.s32.f32 %v2224
      %v2241 = vcvt.s32.f32 %v2225
      %v2242 = vcvt.s32.f32 %v2226
      %v2243 = vcvt.s32.f32 %v2227
      %v2244 = vcvt.s32.f32 %v2228
      %v2245 = vcvt.s32.f32 %v2229
      %v2246 = vcvt.s32.f32 %v2230
      %v2247 = vcvt.s32.f32 %v2231
      %v2248 = vcvt.s32.f32 %v2232
      %v2249 = vcvt.s32.f32 %v2233
      %v2250 = vcvt.s32.f32 %v2234
      %v2251 = vcvt.s32.f32 %v2235
      %v2252 = vcvt.s32.f32 %v2236
      %v2253 = vcvt.s32.f32 %v2237
      %v2254 = vcvt.s32.f32 %v2238
      %v2255 = vld [vmem:[%s6] sm:$0xff]
      %v2256 = vld [vmem:[%s6 + $0x8] sm:$0xff]
      %v2257 = vld [vmem:[%s6 + $0x10] sm:$0xff]
      %v2258 = vld [vmem:[%s6 + $0x18] sm:$0xff]
      %v2259 = vld [vmem:[%s6 + $0x20] sm:$0xff]
      %v2260 = vld [vmem:[%s6 + $0x28] sm:$0xff]
      %v2261 = vld [vmem:[%s6 + $0x30] sm:$0xff]
      %v2262 = vld [vmem:[%s6 + $0x38] sm:$0xff]
      %v2263 = vld [vmem:[%s6 + $0x40] sm:$0xff]
      %v2264 = vld [vmem:[%s6 + $0x48] sm:$0xff]
      %v2265 = vld [vmem:[%s6 + $0x50] sm:$0xff]
      %v2266 = vld [vmem:[%s6 + $0x58] sm:$0xff]
      %v2267 = vld [vmem:[%s6 + $0x60] sm:$0xff]
      %v2268 = vld [vmem:[%s6 + $0x68] sm:$0xff]
      %v2269 = vld [vmem:[%s6 + $0x70] sm:$0xff]
      %v2270 = vld [vmem:[%s6 + $0x78] sm:$0xff]
      %v2271 = vmul.f32 %v2255, %v2156
      %v2272 = vmul.f32 %v2256, %v2157
      %v2273 = vmul.f32 %v2257, %v2158
      %v2274 = vmul.f32 %v2258, %v2159
      %v2275 = vmul.f32 %v2259, %v2160
      %v2276 = vmul.f32 %v2260, %v2161
      %v2277 = vmul.f32 %v2261, %v2162
      %v2278 = vmul.f32 %v2262, %v2163
      %v2279 = vmul.f32 %v2263, %v2164
      %v2280 = vmul.f32 %v2264, %v2165
      %v2281 = vmul.f32 %v2265, %v2166
      %v2282 = vmul.f32 %v2266, %v2167
      %v2283 = vmul.f32 %v2267, %v2168
      %v2284 = vmul.f32 %v2268, %v2169
      %v2285 = vmul.f32 %v2269, %v2170
      %v2286 = vmul.f32 %v2270, %v2171
      %v2287 = vmul.f32 %v2271, %v2239
      %v2288 = vmul.f32 %v2272, %v2240
      %v2289 = vmul.f32 %v2273, %v2241
      %v2290 = vmul.f32 %v2274, %v2242
      %v2291 = vmul.f32 %v2275, %v2243
      %v2292 = vmul.f32 %v2276, %v2244
      %v2293 = vmul.f32 %v2277, %v2245
      %v2294 = vmul.f32 %v2278, %v2246
      %v2295 = vmul.f32 %v2279, %v2247
      %v2296 = vmul.f32 %v2280, %v2248
      %v2297 = vmul.f32 %v2281, %v2249
      %v2298 = vmul.f32 %v2282, %v2250
      %v2299 = vmul.f32 %v2283, %v2251
      %v2300 = vmul.f32 %v2284, %v2252
      %v2301 = vmul.f32 %v2285, %v2253
      %v2302 = vmul.f32 %v2286, %v2254
      %v2303 = vsel %vm1112, %v2287, 0.0
      %v2304 = vsel %vm1112, %v2288, 0.0
      %v2305 = vadd.f32 %v2303, %v2304
      %v2306 = vsel %vm1112, %v2289, 0.0
      %v2307 = vadd.f32 %v2305, %v2306
      %v2308 = vsel %vm1112, %v2290, 0.0
      %v2309 = vadd.f32 %v2307, %v2308
      %v2310 = vsel %vm1112, %v2291, 0.0
      %v2311 = vadd.f32 %v2309, %v2310
      %v2312 = vsel %vm1112, %v2292, 0.0
      %v2313 = vadd.f32 %v2311, %v2312
      %v2314 = vsel %vm1112, %v2293, 0.0
      %v2315 = vadd.f32 %v2313, %v2314
      %v2316 = vsel %vm1112, %v2294, 0.0
      %v2317 = vadd.f32 %v2315, %v2316
      %v2318 = vsel %vm1112, %v2295, 0.0
      %v2319 = vadd.f32 %v2317, %v2318
      %v2320 = vsel %vm1112, %v2296, 0.0
      %v2321 = vadd.f32 %v2319, %v2320
      %v2322 = vsel %vm1112, %v2297, 0.0
      %v2323 = vadd.f32 %v2321, %v2322
      %v2324 = vsel %vm1112, %v2298, 0.0
      %v2325 = vadd.f32 %v2323, %v2324
      %v2326 = vsel %vm1112, %v2299, 0.0
      %v2327 = vadd.f32 %v2325, %v2326
      %v2328 = vsel %vm1112, %v2300, 0.0
      %v2329 = vadd.f32 %v2327, %v2328
      %v2330 = vsel %vm1112, %v2301, 0.0
      %v2331 = vadd.f32 %v2329, %v2330
      %v2332 = vsel %vm1112, %v2302, 0.0
      %v2333 = vadd.f32 %v2331, %v2332
      %v2334 = vrot.slane %v2333, 4
      %v2335 = vadd.f32 %v2333, %v2334
      %v2336 = vrot.slane %v2335, 2
      %v2337 = vadd.f32 %v2335, %v2336
      %v2338 = vrot.slane %v2337, 1
      %v2339 = vadd.f32 %v2337, %v2338
      %vm2340 = vcmp.ge.f32.partialorder %v1884, %v1804
      %vm2341 = vcmp.ge.f32.partialorder %v1885, %v1805
      %vm2342 = vcmp.ge.f32.partialorder %v1886, %v1806
      %vm2343 = vcmp.ge.f32.partialorder %v1887, %v1807
      %vm2344 = vcmp.ge.f32.partialorder %v1888, %v1808
      %vm2345 = vcmp.ge.f32.partialorder %v1889, %v1809
      %vm2346 = vcmp.ge.f32.partialorder %v1890, %v1810
      %vm2347 = vcmp.ge.f32.partialorder %v1891, %v1811
      %vm2348 = vcmp.ge.f32.partialorder %v1892, %v1812
      %vm2349 = vcmp.ge.f32.partialorder %v1893, %v1813
      %vm2350 = vcmp.ge.f32.partialorder %v1894, %v1814
      %vm2351 = vcmp.ge.f32.partialorder %v1895, %v1815
      %vm2352 = vcmp.ge.f32.partialorder %v1896, %v1816
      %vm2353 = vcmp.ge.f32.partialorder %v1897, %v1817
      %vm2354 = vcmp.ge.f32.partialorder %v1898, %v1818
      %vm2355 = vcmp.ge.f32.partialorder %v1899, %v1819
      %v2356 = vsel %vm2340, 1, 0
      %v2357 = vsel %vm2341, 1, 0
      %v2358 = vsel %vm2342, 1, 0
      %v2359 = vsel %vm2343, 1, 0
      %v2360 = vsel %vm2344, 1, 0
      %v2361 = vsel %vm2345, 1, 0
      %v2362 = vsel %vm2346, 1, 0
      %v2363 = vsel %vm2347, 1, 0
      %v2364 = vsel %vm2348, 1, 0
      %v2365 = vsel %vm2349, 1, 0
      %v2366 = vsel %vm2350, 1, 0
      %v2367 = vsel %vm2351, 1, 0
      %v2368 = vsel %vm2352, 1, 0
      %v2369 = vsel %vm2353, 1, 0
      %v2370 = vsel %vm2354, 1, 0
      %v2371 = vsel %vm2355, 1, 0
      %v2372 = vcvt.s32.f32 %v2356
      %v2373 = vcvt.s32.f32 %v2357
      %v2374 = vcvt.s32.f32 %v2358
      %v2375 = vcvt.s32.f32 %v2359
      %v2376 = vcvt.s32.f32 %v2360
      %v2377 = vcvt.s32.f32 %v2361
      %v2378 = vcvt.s32.f32 %v2362
      %v2379 = vcvt.s32.f32 %v2363
      %v2380 = vcvt.s32.f32 %v2364
      %v2381 = vcvt.s32.f32 %v2365
      %v2382 = vcvt.s32.f32 %v2366
      %v2383 = vcvt.s32.f32 %v2367
      %v2384 = vcvt.s32.f32 %v2368
      %v2385 = vcvt.s32.f32 %v2369
      %v2386 = vcvt.s32.f32 %v2370
      %v2387 = vcvt.s32.f32 %v2371
      %v2388 = vmul.f32 %v2372, %v2239
      %v2389 = vmul.f32 %v2373, %v2240
      %v2390 = vmul.f32 %v2374, %v2241
      %v2391 = vmul.f32 %v2375, %v2242
      %v2392 = vmul.f32 %v2376, %v2243
      %v2393 = vmul.f32 %v2377, %v2244
      %v2394 = vmul.f32 %v2378, %v2245
      %v2395 = vmul.f32 %v2379, %v2246
      %v2396 = vmul.f32 %v2380, %v2247
      %v2397 = vmul.f32 %v2381, %v2248
      %v2398 = vmul.f32 %v2382, %v2249
      %v2399 = vmul.f32 %v2383, %v2250
      %v2400 = vmul.f32 %v2384, %v2251
      %v2401 = vmul.f32 %v2385, %v2252
      %v2402 = vmul.f32 %v2386, %v2253
      %v2403 = vmul.f32 %v2387, %v2254
      %v2404 = vsel %vm1112, %v2388, 0.0
      %v2405 = vsel %vm1112, %v2389, 0.0
      %v2406 = vadd.f32 %v2404, %v2405
      %v2407 = vsel %vm1112, %v2390, 0.0
      %v2408 = vadd.f32 %v2406, %v2407
      %v2409 = vsel %vm1112, %v2391, 0.0
      %v2410 = vadd.f32 %v2408, %v2409
      %v2411 = vsel %vm1112, %v2392, 0.0
      %v2412 = vadd.f32 %v2410, %v2411
      %v2413 = vsel %vm1112, %v2393, 0.0
      %v2414 = vadd.f32 %v2412, %v2413
      %v2415 = vsel %vm1112, %v2394, 0.0
      %v2416 = vadd.f32 %v2414, %v2415
      %v2417 = vsel %vm1112, %v2395, 0.0
      %v2418 = vadd.f32 %v2416, %v2417
      %v2419 = vsel %vm1112, %v2396, 0.0
      %v2420 = vadd.f32 %v2418, %v2419
      %v2421 = vsel %vm1112, %v2397, 0.0
      %v2422 = vadd.f32 %v2420, %v2421
      %v2423 = vsel %vm1112, %v2398, 0.0
      %v2424 = vadd.f32 %v2422, %v2423
      %v2425 = vsel %vm1112, %v2399, 0.0
      %v2426 = vadd.f32 %v2424, %v2425
      %v2427 = vsel %vm1112, %v2400, 0.0
      %v2428 = vadd.f32 %v2426, %v2427
      %v2429 = vsel %vm1112, %v2401, 0.0
      %v2430 = vadd.f32 %v2428, %v2429
      %v2431 = vsel %vm1112, %v2402, 0.0
      %v2432 = vadd.f32 %v2430, %v2431
      %v2433 = vsel %vm1112, %v2403, 0.0
      %v2434 = vadd.f32 %v2432, %v2433
      %v2435 = vrot.slane %v2434, 4
      %v2436 = vadd.f32 %v2434, %v2435
      %v2437 = vrot.slane %v2436, 2
      %v2438 = vadd.f32 %v2436, %v2437
      %v2439 = vrot.slane %v2438, 1
      %v2440 = vadd.f32 %v2438, %v2439
      %2442 = vset.pattern.permute.xlu0 0
      %2443 = vperm.xlu0 %2442, %v2339
      %v2444 = vpop.permute.xlu0 %2443
      %2446 = vst [vmem:[#allocation8] sm:$0xff] %v2444
      %2448 = vset.pattern.permute.xlu0 0
      %2449 = vperm.xlu0 %2448, %v2440
      %v2450 = vpop.permute.xlu0 %2449
      %2452 = vst [vmem:[#allocation10] sm:$0xff] %v2450
    $region37: #{tpu_custom_call.1} parent=1 // pred_fallthru
      _
    // Predicated region
    $region38: #{tpu_custom_call.1} parent=1 // pred_check
      _
    $region39: #{tpu_custom_call.1} parent=1 // pred_check_branch
      %2454 = sbr.rel (0) target = $region41
    $region40: #{tpu_custom_call.1} parent=1 // pred_region
      %s2456 = ssub.s32 128, 128
      %2457 = vsyncadd [#allocation9], %s2456
      %s2459 = sshll.u32 [#allocation8], 4
      %s2460 = int_to_ptr.vmem [resolvable:$true] %s2459
      %2462 = dma.vmem_to_hbm [thread:$0]  %s2460, 128, %s7, [#allocation9]
    $region41: #{tpu_custom_call.1} parent=1 // pred_fallthru
      _
    // Predicated region
    $region42: #{tpu_custom_call.1} parent=1 // pred_check
      _
    $region43: #{tpu_custom_call.1} parent=1 // pred_check_branch
      %2464 = sbr.rel (0) target = $region45
    $region44: #{tpu_custom_call.1} parent=1 // pred_region
      %s2466 = ssub.s32 128, 128
      %2467 = vsyncadd [#allocation11], %s2466
      %s2469 = sshll.u32 [#allocation10], 4
      %s2470 = int_to_ptr.vmem [resolvable:$true] %s2469
      %2472 = dma.vmem_to_hbm [thread:$0]  %s2470, 128, %s8, [#allocation11]
    $region45: #{tpu_custom_call.1} parent=1 // pred_fallthru
      _
    // Predicated region
    $region46: #{tpu_custom_call.1} parent=1 // pred_check
      _
    $region47: #{tpu_custom_call.1} parent=1 // pred_check_branch
      %2474 = sbr.rel (0) target = $region49
    $region48: #{tpu_custom_call.1} parent=1 // pred_region
      %2475 = dma.done [#allocation9], 128
    $region49: #{tpu_custom_call.1} parent=1 // pred_fallthru
      _
    // Predicated region
    $region50: #{tpu_custom_call.1} parent=1 // pred_check
      _
    $region51: #{tpu_custom_call.1} parent=1 // pred_check_branch
      %2477 = sbr.rel (0) target = $region53
    $region52: #{tpu_custom_call.1} parent=1 // pred_region
      %2478 = dma.done [#allocation11], 128
    $region53: #{tpu_custom_call.1} parent=1 // pred_fallthru
      _
    %2479 = vsyncpa [#allocation9], 1
    %2480 = vsyncpa [#allocation11], 1

</llo_original>
